<compile_context>
chip_gen: v7x
topology: tpu7x:2x2x1
jax: 0.10.0
libtpu: 0.0.40
codegen_flags: <defaults>
</compile_context>

<pallas_src>
import functools

import jax
import jax.numpy as jnp
from jax.experimental import pallas as pl
from jax.experimental.pallas import tpu as pltpu


def self_attention_kernel(v_ref, k_ref, q_ref,
                          wv_ref, wk_ref, wq_ref, wo_ref, bo_ref,
                          o_ref, acc_ref, *,
                          heads, head_dim, batch, q_len, k_len, v_len):
    """Fused multi-head self-attention, whole batch in one grid step.

    v/k/q_ref : (N*L, E) 2-D activation slabs (lane-dense layout)
    wv/wk/wq  : (E, E) block-diagonal, pre-transposed per-head weights
                (1/sqrt(embed_size) already folded into wq)
    wo        : (E, E) fc_out weight pre-transposed to (in, out); bo: (1, E)
    o_ref     : (N*Lq, E) output slab
    acc_ref   : (N*Lq, E) f32 VMEM scratch holding the concatenated head outputs
    """
    f32 = jnp.float32
    embed = heads * head_dim

    # --- per-head Q/K/V projections as three E-wide matmuls (block-diag weights) ---
    # (Kept in f32: at these toy sizes the kernel is overhead-bound, not MXU-bound,
    #  so we skip the bf16 cast to preserve tight numerics.)
    vp = jnp.dot(v_ref[...], wv_ref[...], preferred_element_type=f32)   # (N*Lv, E)
    kp = jnp.dot(k_ref[...], wk_ref[...], preferred_element_type=f32)   # (N*Lk, E)
    qp = jnp.dot(q_ref[...], wq_ref[...], preferred_element_type=f32)   # (N*Lq, E)

    vp3 = vp.reshape(batch, v_len, embed)
    kp3 = kp.reshape(batch, k_len, embed)
    qp3 = qp.reshape(batch, q_len, embed)

    # --- attention core: batched over the batch dim, unrolled over heads ---
    for h in range(heads):
        lo = h * head_dim
        hi = lo + head_dim
        qh = qp3[:, :, lo:hi]                                    # (N, Lq, hd)
        kh = kp3[:, :, lo:hi]                                    # (N, Lk, hd)
        vh = vp3[:, :, lo:hi]                                    # (N, Lv, hd)

        # scale (1/sqrt(E)) already folded into Wq on the host.
        energy = jnp.einsum('nqd,nkd->nqk', qh, kh,
                            preferred_element_type=f32)          # (N, Lq, Lk)
        # TODO(synk): mask branch omitted — the reference calls masked_Fill (typo)
        # which would raise; semantics reproduced for mask=None only.
        m = jnp.max(energy, axis=-1, keepdims=True)
        p = jnp.exp(energy - m)
        denom = jnp.sum(p, axis=-1, keepdims=True)
        attn = p * pl.reciprocal(denom, approx=True)             # EUP vrcp (free slot)

        oh = jnp.einsum('nqk,nkd->nqd', attn, vh,
                        preferred_element_type=f32)              # (N, Lq, hd)
        # Concat-free: drop each head straight into its lane slice of the scratch.
        acc_ref[:, lo:hi] = oh.reshape(batch * q_len, head_dim)

    # --- fc_out: one E-wide matmul + bias, lane-dense 2-D store ---
    out = jnp.dot(acc_ref[...], wo_ref[...], preferred_element_type=f32) + bo_ref[...]
    o_ref[...] = out.astype(o_ref.dtype)


def self_attention(values, keys, query, params, *, heads, mask=None):
    """values/keys/query: (N, L, E) float32. mask must be None."""
    assert mask is None, "mask path not implemented (mask=None only)"
    N, Lv, E = values.shape
    _, Lk, _ = keys.shape
    _, Lq, _ = query.shape
    head_dim = E // heads
    assert head_dim * heads == E

    scale = 1.0 / (float(E) ** 0.5)      # reference scales by sqrt(embed_size), not sqrt(head_dim)

    # Host-side weight prep (done once by XLA, free for the kernel):
    #  * transpose every Linear weight to (in, out) so the kernel does plain x @ W,
    #  * replicate the shared per-head (hd, hd) weights onto an (E, E) block diagonal
    #    so all heads are projected with a single E-wide matmul,
    #  * fold the 1/sqrt(E) softmax scale into Wq.
    eye_h = jnp.eye(heads, dtype=jnp.float32)
    wv_bd = jnp.kron(eye_h, params["wv"].T)                  # (E, E)
    wk_bd = jnp.kron(eye_h, params["wk"].T)                  # (E, E)
    wq_bd = jnp.kron(eye_h, params["wq"].T * scale)          # (E, E), scale folded in
    wo_t = params["wo"].T                                    # (E, E)
    bo = params["bo"].reshape(1, E)

    # Lane-dense 2-D slabs; the whole batch is processed in a single grid step
    # (total footprint is a few KB — far below VMEM on v5e/v6e/v7x), eliminating
    # per-step pipeline overhead that dominated the previous grid=(N,) version.
    v2 = values.reshape(N * Lv, E)
    k2 = keys.reshape(N * Lk, E)
    q2 = query.reshape(N * Lq, E)

    kernel = functools.partial(
        self_attention_kernel, heads=heads, head_dim=head_dim,
        batch=N, q_len=Lq, k_len=Lk, v_len=Lv)

    out2 = pl.pallas_call(
        kernel,
        out_shape=jax.ShapeDtypeStruct((N * Lq, E), jnp.float32),
        grid_spec=pltpu.PrefetchScalarGridSpec(
            num_scalar_prefetch=0,
            grid=(1,),
            in_specs=[
                pl.BlockSpec((N * Lv, E), lambda i: (0, 0)),   # values slab
                pl.BlockSpec((N * Lk, E), lambda i: (0, 0)),   # keys slab
                pl.BlockSpec((N * Lq, E), lambda i: (0, 0)),   # query slab
                pl.BlockSpec((E, E), lambda i: (0, 0)),        # Wv block-diag
                pl.BlockSpec((E, E), lambda i: (0, 0)),        # Wk block-diag
                pl.BlockSpec((E, E), lambda i: (0, 0)),        # Wq block-diag (scaled)
                pl.BlockSpec((E, E), lambda i: (0, 0)),        # Wo^T
                pl.BlockSpec((1, E), lambda i: (0, 0)),        # bo
            ],
            out_specs=pl.BlockSpec((N * Lq, E), lambda i: (0, 0)),
            scratch_shapes=[pltpu.VMEM((N * Lq, E), jnp.float32)],
        ),
        compiler_params=pltpu.CompilerParams(
            dimension_semantics=("arbitrary",)),
    )(v2, k2, q2, wv_bd, wk_bd, wq_bd, wo_t, bo)

    return out2.reshape(N, Lq, E)


def reference(values, keys, query, params, *, heads):
    """Pure-JAX reference matching the PyTorch forward (mask=None)."""
    N, Lv, E = values.shape
    Lk = keys.shape[1]
    Lq = query.shape[1]
    hd = E // heads
    v = values.reshape(N, Lv, heads, hd) @ params["wv"].T
    k = keys.reshape(N, Lk, heads, hd) @ params["wk"].T
    q = query.reshape(N, Lq, heads, hd) @ params["wq"].T
    energy = jnp.einsum("nqhd,nkhd->nhqk", q, k)
    attn = jax.nn.softmax(energy / (E ** 0.5), axis=3)
    out = jnp.einsum("nhql,nlhd->nqhd", attn, v).reshape(N, Lq, E)
    return out @ params["wo"].T + params["bo"]


if __name__ == "__main__":
    embed_size = 32
    heads = 4
    head_dim = embed_size // heads
    N, L = 2, 8

    key = jax.random.PRNGKey(0)
    kv, kk, kq, kwv, kwk, kwq, kwo, kbo = jax.random.split(key, 8)

    values = jax.random.normal(kv, (N, L, embed_size), dtype=jnp.float32)
    keys_in = jax.random.normal(kk, (N, L, embed_size), dtype=jnp.float32)
    query = jax.random.normal(kq, (N, L, embed_size), dtype=jnp.float32)

    # Deterministic parameter init (nn.Linear-shaped weights: (out, in)).
    params = {
        "wv": jax.random.normal(kwv, (head_dim, head_dim), dtype=jnp.float32) * 0.2,
        "wk": jax.random.normal(kwk, (head_dim, head_dim), dtype=jnp.float32) * 0.2,
        "wq": jax.random.normal(kwq, (head_dim, head_dim), dtype=jnp.float32) * 0.2,
        "wo": jax.random.normal(kwo, (embed_size, embed_size), dtype=jnp.float32) * 0.1,
        "bo": jax.random.normal(kbo, (embed_size,), dtype=jnp.float32) * 0.1,
    }

    out = self_attention(values, keys_in, query, params, heads=heads)
    out = jax.block_until_ready(out)

    ref = reference(values, keys_in, query, params, heads=heads)
    assert out.shape == (N, L, embed_size)
    # Tolerance loosened slightly vs. the pure-f32 1e-4 because the softmax
    # denominator uses the EUP approximate reciprocal (pl.reciprocal(approx=True)).
    assert jnp.allclose(out, ref, atol=2e-3, rtol=2e-3), "mismatch vs pure-JAX reference"

    print("KERNEL_OK")
</pallas_src>

<mosaic_0001>
module attributes {stable_mosaic.version = 11 : i64} {
  func.func @self_attention_kernel(%arg0: i32, %arg1: memref<16x32xf32, #tpu.memory_space<vmem>>, %arg2: memref<16x32xf32, #tpu.memory_space<vmem>>, %arg3: memref<16x32xf32, #tpu.memory_space<vmem>>, %arg4: memref<32x32xf32, #tpu.memory_space<vmem>>, %arg5: memref<32x32xf32, #tpu.memory_space<vmem>>, %arg6: memref<32x32xf32, #tpu.memory_space<vmem>>, %arg7: memref<32x32xf32, #tpu.memory_space<vmem>>, %arg8: memref<1x32xf32, #tpu.memory_space<vmem>>, %arg9: memref<16x32xf32, #tpu.memory_space<vmem>>, %arg10: memref<16x32xf32, #tpu.memory_space<vmem>>) attributes {dimension_semantics = [#tpu.dimension_semantics<arbitrary>], iteration_bounds = array<i64: 1>, scalar_prefetch = 0 : i64, scratch_operands = 1 : i64, tpu.core_type = #tpu.core_type<tc>, window_params = [{pipeline_mode = #tpu.pipeline_mode<synchronous>, transform_indices = @transform_0, window_bounds = array<i64: 16, 32>}, {pipeline_mode = #tpu.pipeline_mode<synchronous>, transform_indices = @transform_1, window_bounds = array<i64: 16, 32>}, {pipeline_mode = #tpu.pipeline_mode<synchronous>, transform_indices = @transform_2, window_bounds = array<i64: 16, 32>}, {pipeline_mode = #tpu.pipeline_mode<synchronous>, transform_indices = @transform_3, window_bounds = array<i64: 32, 32>}, {pipeline_mode = #tpu.pipeline_mode<synchronous>, transform_indices = @transform_4, window_bounds = array<i64: 32, 32>}, {pipeline_mode = #tpu.pipeline_mode<synchronous>, transform_indices = @transform_5, window_bounds = array<i64: 32, 32>}, {pipeline_mode = #tpu.pipeline_mode<synchronous>, transform_indices = @transform_6, window_bounds = array<i64: 32, 32>}, {pipeline_mode = #tpu.pipeline_mode<synchronous>, transform_indices = @transform_7, window_bounds = array<i64: 1, 32>}, {pipeline_mode = #tpu.pipeline_mode<synchronous>, transform_indices = @transform_8, window_bounds = array<i64: 16, 32>}]} {
    %c0 = arith.constant 0 : index
    %c0_0 = arith.constant 0 : index
    %0 = vector.load %arg1[%c0, %c0_0] : memref<16x32xf32, #tpu.memory_space<vmem>>, vector<16x32xf32>
    %c0_1 = arith.constant 0 : index
    %c0_2 = arith.constant 0 : index
    %1 = vector.load %arg4[%c0_1, %c0_2] : memref<32x32xf32, #tpu.memory_space<vmem>>, vector<32x32xf32>
    %cst = arith.constant dense<0.000000e+00> : vector<16x32xf32>
    %2 = tpu.matmul %0, %1, %cst {dimension_numbers = #tpu.dot_dimension_numbers<[1], [0], [0], [1], [0, 0, 1, 1], [], []>} : vector<16x32xf32>, vector<32x32xf32>, vector<16x32xf32> -> vector<16x32xf32>
    %c0_3 = arith.constant 0 : index
    %c0_4 = arith.constant 0 : index
    %3 = vector.load %arg2[%c0_3, %c0_4] : memref<16x32xf32, #tpu.memory_space<vmem>>, vector<16x32xf32>
    %c0_5 = arith.constant 0 : index
    %c0_6 = arith.constant 0 : index
    %4 = vector.load %arg5[%c0_5, %c0_6] : memref<32x32xf32, #tpu.memory_space<vmem>>, vector<32x32xf32>
    %cst_7 = arith.constant dense<0.000000e+00> : vector<16x32xf32>
    %5 = tpu.matmul %3, %4, %cst_7 {dimension_numbers = #tpu.dot_dimension_numbers<[1], [0], [0], [1], [0, 0, 1, 1], [], []>} : vector<16x32xf32>, vector<32x32xf32>, vector<16x32xf32> -> vector<16x32xf32>
    %c0_8 = arith.constant 0 : index
    %c0_9 = arith.constant 0 : index
    %6 = vector.load %arg3[%c0_8, %c0_9] : memref<16x32xf32, #tpu.memory_space<vmem>>, vector<16x32xf32>
    %c0_10 = arith.constant 0 : index
    %c0_11 = arith.constant 0 : index
    %7 = vector.load %arg6[%c0_10, %c0_11] : memref<32x32xf32, #tpu.memory_space<vmem>>, vector<32x32xf32>
    %cst_12 = arith.constant dense<0.000000e+00> : vector<16x32xf32>
    %8 = tpu.matmul %6, %7, %cst_12 {dimension_numbers = #tpu.dot_dimension_numbers<[1], [0], [0], [1], [0, 0, 1, 1], [], []>} : vector<16x32xf32>, vector<32x32xf32>, vector<16x32xf32> -> vector<16x32xf32>
    %9 = vector.shape_cast %2 : vector<16x32xf32> to vector<2x8x32xf32>
    %10 = vector.shape_cast %5 : vector<16x32xf32> to vector<2x8x32xf32>
    %11 = vector.shape_cast %8 : vector<16x32xf32> to vector<2x8x32xf32>
    %12 = vector.extract_strided_slice %11 {offsets = [0, 0, 0], sizes = [2, 8, 8], strides = [1, 1, 1]} : vector<2x8x32xf32> to vector<2x8x8xf32>
    %13 = vector.extract_strided_slice %10 {offsets = [0, 0, 0], sizes = [2, 8, 8], strides = [1, 1, 1]} : vector<2x8x32xf32> to vector<2x8x8xf32>
    %14 = vector.extract_strided_slice %9 {offsets = [0, 0, 0], sizes = [2, 8, 8], strides = [1, 1, 1]} : vector<2x8x32xf32> to vector<2x8x8xf32>
    "tpu.trace_start"() <{level = 10 : i32, message = "nqd,nkd->nqk"}> : () -> ()
    %cst_13 = arith.constant dense<0.000000e+00> : vector<2x8x8xf32>
    %15 = tpu.matmul %12, %13, %cst_13 {dimension_numbers = #tpu.dot_dimension_numbers<[2], [2], [1], [1], [0, 0, 0, 1, 1, 1], [0], [0]>} : vector<2x8x8xf32>, vector<2x8x8xf32>, vector<2x8x8xf32> -> vector<2x8x8xf32>
    "tpu.trace_stop"() : () -> ()
    %cst_14 = arith.constant dense<0xFF800000> : vector<2x8xf32>
    %16 = vector.multi_reduction <maximumf>, %15, %cst_14 [2] : vector<2x8x8xf32> to vector<2x8xf32>
    %17 = vector.shape_cast %16 : vector<2x8xf32> to vector<2x8x1xf32>
    %18 = vector.broadcast %17 : vector<2x8x1xf32> to vector<2x8x8xf32>
    %19 = arith.subf %15, %18 : vector<2x8x8xf32>
    %20 = math.exp %19 : vector<2x8x8xf32>
    %cst_15 = arith.constant dense<0.000000e+00> : vector<2x8xf32>
    %21 = vector.multi_reduction <add>, %20, %cst_15 [2] : vector<2x8x8xf32> to vector<2x8xf32>
    %22 = vector.shape_cast %21 : vector<2x8xf32> to vector<2x8x1xf32>
    %23 = tpu.reciprocal %22 {approx = true} : vector<2x8x1xf32> -> vector<2x8x1xf32>
    %24 = vector.broadcast %23 : vector<2x8x1xf32> to vector<2x8x8xf32>
    %25 = arith.mulf %20, %24 : vector<2x8x8xf32>
    "tpu.trace_start"() <{level = 10 : i32, message = "nqk,nkd->nqd"}> : () -> ()
    %cst_16 = arith.constant dense<0.000000e+00> : vector<2x8x8xf32>
    %26 = tpu.matmul %25, %14, %cst_16 {dimension_numbers = #tpu.dot_dimension_numbers<[2], [1], [1], [2], [0, 0, 0, 1, 1, 2], [0], [0]>} : vector<2x8x8xf32>, vector<2x8x8xf32>, vector<2x8x8xf32> -> vector<2x8x8xf32>
    "tpu.trace_stop"() : () -> ()
    %27 = vector.shape_cast %26 : vector<2x8x8xf32> to vector<16x8xf32>
    %c0_17 = arith.constant 0 : index
    %c0_18 = arith.constant 0 : index
    %28 = vector.load %arg10[%c0_17, %c0_18] : memref<16x32xf32, #tpu.memory_space<vmem>>, vector<16x8xf32>
    tpu.vector_store %arg10[%c0_17, %c0_18], %27 {strides = array<i32>} : memref<16x32xf32, #tpu.memory_space<vmem>>, vector<16x8xf32>,
    %29 = vector.extract_strided_slice %11 {offsets = [0, 0, 8], sizes = [2, 8, 8], strides = [1, 1, 1]} : vector<2x8x32xf32> to vector<2x8x8xf32>
    %30 = vector.extract_strided_slice %10 {offsets = [0, 0, 8], sizes = [2, 8, 8], strides = [1, 1, 1]} : vector<2x8x32xf32> to vector<2x8x8xf32>
    %31 = vector.extract_strided_slice %9 {offsets = [0, 0, 8], sizes = [2, 8, 8], strides = [1, 1, 1]} : vector<2x8x32xf32> to vector<2x8x8xf32>
    "tpu.trace_start"() <{level = 10 : i32, message = "nqd,nkd->nqk"}> : () -> ()
    %cst_19 = arith.constant dense<0.000000e+00> : vector<2x8x8xf32>
    %32 = tpu.matmul %29, %30, %cst_19 {dimension_numbers = #tpu.dot_dimension_numbers<[2], [2], [1], [1], [0, 0, 0, 1, 1, 1], [0], [0]>} : vector<2x8x8xf32>, vector<2x8x8xf32>, vector<2x8x8xf32> -> vector<2x8x8xf32>
    "tpu.trace_stop"() : () -> ()
    %cst_20 = arith.constant dense<0xFF800000> : vector<2x8xf32>
    %33 = vector.multi_reduction <maximumf>, %32, %cst_20 [2] : vector<2x8x8xf32> to vector<2x8xf32>
    %34 = vector.shape_cast %33 : vector<2x8xf32> to vector<2x8x1xf32>
    %35 = vector.broadcast %34 : vector<2x8x1xf32> to vector<2x8x8xf32>
    %36 = arith.subf %32, %35 : vector<2x8x8xf32>
    %37 = math.exp %36 : vector<2x8x8xf32>
    %cst_21 = arith.constant dense<0.000000e+00> : vector<2x8xf32>
    %38 = vector.multi_reduction <add>, %37, %cst_21 [2] : vector<2x8x8xf32> to vector<2x8xf32>
    %39 = vector.shape_cast %38 : vector<2x8xf32> to vector<2x8x1xf32>
    %40 = tpu.reciprocal %39 {approx = true} : vector<2x8x1xf32> -> vector<2x8x1xf32>
    %41 = vector.broadcast %40 : vector<2x8x1xf32> to vector<2x8x8xf32>
    %42 = arith.mulf %37, %41 : vector<2x8x8xf32>
    "tpu.trace_start"() <{level = 10 : i32, message = "nqk,nkd->nqd"}> : () -> ()
    %cst_22 = arith.constant dense<0.000000e+00> : vector<2x8x8xf32>
    %43 = tpu.matmul %42, %31, %cst_22 {dimension_numbers = #tpu.dot_dimension_numbers<[2], [1], [1], [2], [0, 0, 0, 1, 1, 2], [0], [0]>} : vector<2x8x8xf32>, vector<2x8x8xf32>, vector<2x8x8xf32> -> vector<2x8x8xf32>
    "tpu.trace_stop"() : () -> ()
    %44 = vector.shape_cast %43 : vector<2x8x8xf32> to vector<16x8xf32>
    %c0_23 = arith.constant 0 : index
    %c8 = arith.constant 8 : index
    %45 = vector.load %arg10[%c0_23, %c8] : memref<16x32xf32, #tpu.memory_space<vmem>>, vector<16x8xf32>
    tpu.vector_store %arg10[%c0_23, %c8], %44 {strides = array<i32>} : memref<16x32xf32, #tpu.memory_space<vmem>>, vector<16x8xf32>,
    %46 = vector.extract_strided_slice %11 {offsets = [0, 0, 16], sizes = [2, 8, 8], strides = [1, 1, 1]} : vector<2x8x32xf32> to vector<2x8x8xf32>
    %47 = vector.extract_strided_slice %10 {offsets = [0, 0, 16], sizes = [2, 8, 8], strides = [1, 1, 1]} : vector<2x8x32xf32> to vector<2x8x8xf32>
    %48 = vector.extract_strided_slice %9 {offsets = [0, 0, 16], sizes = [2, 8, 8], strides = [1, 1, 1]} : vector<2x8x32xf32> to vector<2x8x8xf32>
    "tpu.trace_start"() <{level = 10 : i32, message = "nqd,nkd->nqk"}> : () -> ()
    %cst_24 = arith.constant dense<0.000000e+00> : vector<2x8x8xf32>
    %49 = tpu.matmul %46, %47, %cst_24 {dimension_numbers = #tpu.dot_dimension_numbers<[2], [2], [1], [1], [0, 0, 0, 1, 1, 1], [0], [0]>} : vector<2x8x8xf32>, vector<2x8x8xf32>, vector<2x8x8xf32> -> vector<2x8x8xf32>
    "tpu.trace_stop"() : () -> ()
    %cst_25 = arith.constant dense<0xFF800000> : vector<2x8xf32>
    %50 = vector.multi_reduction <maximumf>, %49, %cst_25 [2] : vector<2x8x8xf32> to vector<2x8xf32>
    %51 = vector.shape_cast %50 : vector<2x8xf32> to vector<2x8x1xf32>
    %52 = vector.broadcast %51 : vector<2x8x1xf32> to vector<2x8x8xf32>
    %53 = arith.subf %49, %52 : vector<2x8x8xf32>
    %54 = math.exp %53 : vector<2x8x8xf32>
    %cst_26 = arith.constant dense<0.000000e+00> : vector<2x8xf32>
    %55 = vector.multi_reduction <add>, %54, %cst_26 [2] : vector<2x8x8xf32> to vector<2x8xf32>
    %56 = vector.shape_cast %55 : vector<2x8xf32> to vector<2x8x1xf32>
    %57 = tpu.reciprocal %56 {approx = true} : vector<2x8x1xf32> -> vector<2x8x1xf32>
    %58 = vector.broadcast %57 : vector<2x8x1xf32> to vector<2x8x8xf32>
    %59 = arith.mulf %54, %58 : vector<2x8x8xf32>
    "tpu.trace_start"() <{level = 10 : i32, message = "nqk,nkd->nqd"}> : () -> ()
    %cst_27 = arith.constant dense<0.000000e+00> : vector<2x8x8xf32>
    %60 = tpu.matmul %59, %48, %cst_27 {dimension_numbers = #tpu.dot_dimension_numbers<[2], [1], [1], [2], [0, 0, 0, 1, 1, 2], [0], [0]>} : vector<2x8x8xf32>, vector<2x8x8xf32>, vector<2x8x8xf32> -> vector<2x8x8xf32>
    "tpu.trace_stop"() : () -> ()
    %61 = vector.shape_cast %60 : vector<2x8x8xf32> to vector<16x8xf32>
    %c0_28 = arith.constant 0 : index
    %c16 = arith.constant 16 : index
    %62 = vector.load %arg10[%c0_28, %c16] : memref<16x32xf32, #tpu.memory_space<vmem>>, vector<16x8xf32>
    tpu.vector_store %arg10[%c0_28, %c16], %61 {strides = array<i32>} : memref<16x32xf32, #tpu.memory_space<vmem>>, vector<16x8xf32>,
    %63 = vector.extract_strided_slice %11 {offsets = [0, 0, 24], sizes = [2, 8, 8], strides = [1, 1, 1]} : vector<2x8x32xf32> to vector<2x8x8xf32>
    %64 = vector.extract_strided_slice %10 {offsets = [0, 0, 24], sizes = [2, 8, 8], strides = [1, 1, 1]} : vector<2x8x32xf32> to vector<2x8x8xf32>
    %65 = vector.extract_strided_slice %9 {offsets = [0, 0, 24], sizes = [2, 8, 8], strides = [1, 1, 1]} : vector<2x8x32xf32> to vector<2x8x8xf32>
    "tpu.trace_start"() <{level = 10 : i32, message = "nqd,nkd->nqk"}> : () -> ()
    %cst_29 = arith.constant dense<0.000000e+00> : vector<2x8x8xf32>
    %66 = tpu.matmul %63, %64, %cst_29 {dimension_numbers = #tpu.dot_dimension_numbers<[2], [2], [1], [1], [0, 0, 0, 1, 1, 1], [0], [0]>} : vector<2x8x8xf32>, vector<2x8x8xf32>, vector<2x8x8xf32> -> vector<2x8x8xf32>
    "tpu.trace_stop"() : () -> ()
    %cst_30 = arith.constant dense<0xFF800000> : vector<2x8xf32>
    %67 = vector.multi_reduction <maximumf>, %66, %cst_30 [2] : vector<2x8x8xf32> to vector<2x8xf32>
    %68 = vector.shape_cast %67 : vector<2x8xf32> to vector<2x8x1xf32>
    %69 = vector.broadcast %68 : vector<2x8x1xf32> to vector<2x8x8xf32>
    %70 = arith.subf %66, %69 : vector<2x8x8xf32>
    %71 = math.exp %70 : vector<2x8x8xf32>
    %cst_31 = arith.constant dense<0.000000e+00> : vector<2x8xf32>
    %72 = vector.multi_reduction <add>, %71, %cst_31 [2] : vector<2x8x8xf32> to vector<2x8xf32>
    %73 = vector.shape_cast %72 : vector<2x8xf32> to vector<2x8x1xf32>
    %74 = tpu.reciprocal %73 {approx = true} : vector<2x8x1xf32> -> vector<2x8x1xf32>
    %75 = vector.broadcast %74 : vector<2x8x1xf32> to vector<2x8x8xf32>
    %76 = arith.mulf %71, %75 : vector<2x8x8xf32>
    "tpu.trace_start"() <{level = 10 : i32, message = "nqk,nkd->nqd"}> : () -> ()
    %cst_32 = arith.constant dense<0.000000e+00> : vector<2x8x8xf32>
    %77 = tpu.matmul %76, %65, %cst_32 {dimension_numbers = #tpu.dot_dimension_numbers<[2], [1], [1], [2], [0, 0, 0, 1, 1, 2], [0], [0]>} : vector<2x8x8xf32>, vector<2x8x8xf32>, vector<2x8x8xf32> -> vector<2x8x8xf32>
    "tpu.trace_stop"() : () -> ()
    %78 = vector.shape_cast %77 : vector<2x8x8xf32> to vector<16x8xf32>
    %c0_33 = arith.constant 0 : index
    %c24 = arith.constant 24 : index
    %79 = vector.load %arg10[%c0_33, %c24] : memref<16x32xf32, #tpu.memory_space<vmem>>, vector<16x8xf32>
    tpu.vector_store %arg10[%c0_33, %c24], %78 {strides = array<i32>} : memref<16x32xf32, #tpu.memory_space<vmem>>, vector<16x8xf32>,
    %c0_34 = arith.constant 0 : index
    %c0_35 = arith.constant 0 : index
    %80 = vector.load %arg10[%c0_34, %c0_35] : memref<16x32xf32, #tpu.memory_space<vmem>>, vector<16x32xf32>
    %c0_36 = arith.constant 0 : index
    %c0_37 = arith.constant 0 : index
    %81 = vector.load %arg7[%c0_36, %c0_37] : memref<32x32xf32, #tpu.memory_space<vmem>>, vector<32x32xf32>
    %cst_38 = arith.constant dense<0.000000e+00> : vector<16x32xf32>
    %82 = tpu.matmul %80, %81, %cst_38 {dimension_numbers = #tpu.dot_dimension_numbers<[1], [0], [0], [1], [0, 0, 1, 1], [], []>} : vector<16x32xf32>, vector<32x32xf32>, vector<16x32xf32> -> vector<16x32xf32>
    %c0_39 = arith.constant 0 : index
    %c0_40 = arith.constant 0 : index
    %83 = vector.load %arg8[%c0_39, %c0_40] : memref<1x32xf32, #tpu.memory_space<vmem>>, vector<1x32xf32>
    %84 = vector.broadcast %83 : vector<1x32xf32> to vector<16x32xf32>
    %85 = arith.addf %82, %84 : vector<16x32xf32>
    %c0_41 = arith.constant 0 : index
    %c0_42 = arith.constant 0 : index
    %86 = vector.load %arg9[%c0_41, %c0_42] : memref<16x32xf32, #tpu.memory_space<vmem>>, vector<16x32xf32>
    tpu.vector_store %arg9[%c0_41, %c0_42], %85 {strides = array<i32>} : memref<16x32xf32, #tpu.memory_space<vmem>>, vector<16x32xf32>,
    return
  }
  func.func @transform_0(%arg0: i32) -> (i32, i32) {
    %c0_i32 = arith.constant 0 : i32
    %c0_i32_0 = arith.constant 0 : i32
    %c0_i32_1 = arith.constant 0 : i32
    return %c0_i32, %c0_i32_0 : i32, i32
  }
  func.func @transform_1(%arg0: i32) -> (i32, i32) {
    %c0_i32 = arith.constant 0 : i32
    %c0_i32_0 = arith.constant 0 : i32
    %c0_i32_1 = arith.constant 0 : i32
    return %c0_i32, %c0_i32_0 : i32, i32
  }
  func.func @transform_2(%arg0: i32) -> (i32, i32) {
    %c0_i32 = arith.constant 0 : i32
    %c0_i32_0 = arith.constant 0 : i32
    %c0_i32_1 = arith.constant 0 : i32
    return %c0_i32, %c0_i32_0 : i32, i32
  }
  func.func @transform_3(%arg0: i32) -> (i32, i32) {
    %c0_i32 = arith.constant 0 : i32
    %c0_i32_0 = arith.constant 0 : i32
    %c0_i32_1 = arith.constant 0 : i32
    return %c0_i32, %c0_i32_0 : i32, i32
  }
  func.func @transform_4(%arg0: i32) -> (i32, i32) {
    %c0_i32 = arith.constant 0 : i32
    %c0_i32_0 = arith.constant 0 : i32
    %c0_i32_1 = arith.constant 0 : i32
    return %c0_i32, %c0_i32_0 : i32, i32
  }
  func.func @transform_5(%arg0: i32) -> (i32, i32) {
    %c0_i32 = arith.constant 0 : i32
    %c0_i32_0 = arith.constant 0 : i32
    %c0_i32_1 = arith.constant 0 : i32
    return %c0_i32, %c0_i32_0 : i32, i32
  }
  func.func @transform_6(%arg0: i32) -> (i32, i32) {
    %c0_i32 = arith.constant 0 : i32
    %c0_i32_0 = arith.constant 0 : i32
    %c0_i32_1 = arith.constant 0 : i32
    return %c0_i32, %c0_i32_0 : i32, i32
  }
  func.func @transform_7(%arg0: i32) -> (i32, i32) {
    %c0_i32 = arith.constant 0 : i32
    %c0_i32_0 = arith.constant 0 : i32
    %c0_i32_1 = arith.constant 0 : i32
    return %c0_i32, %c0_i32_0 : i32, i32
  }
  func.func @transform_8(%arg0: i32) -> (i32, i32) {
    %c0_i32 = arith.constant 0 : i32
    %c0_i32_0 = arith.constant 0 : i32
    %c0_i32_1 = arith.constant 0 : i32
    return %c0_i32, %c0_i32_0 : i32, i32
  }
}

</mosaic_0001>

<llo_original>
// kernel: tpu_custom_call.1
$region0: #{tpu_custom_call.1}
  #allocation0 [shape = 'u32[]', space=smem, size = 0x4, offset = 0x4, fixed_abs, tag = 'smem constant byte address 0x4 - core index']
  #allocation1 [shape = 'u32[144,128]{1,0:T(1,128)}', space=vmem, size = 0x12000, scoped, tag = 'internal scratch']
  #allocation2 [shape = 'f32[16,32]{1,0:T(8,128)}', space=vmem, size = 0x2000, scoped, tag = 'scratch operand']
  %s0 = inlined_call_operand.hbm [shape: f32[16,32], index: 0, kind: input, shape index: {}]
  %s1 = inlined_call_operand.hbm [shape: f32[16,32], index: 1, kind: input, shape index: {}]
  %s2 = inlined_call_operand.hbm [shape: f32[16,32], index: 2, kind: input, shape index: {}]
  %s3 = inlined_call_operand.hbm [shape: f32[32,32], index: 3, kind: input, shape index: {}]
  %s4 = inlined_call_operand.hbm [shape: f32[32,32], index: 4, kind: input, shape index: {}]
  %s5 = inlined_call_operand.hbm [shape: f32[32,32], index: 5, kind: input, shape index: {}]
  %s6 = inlined_call_operand.hbm [shape: f32[32,32], index: 6, kind: input, shape index: {}]
  %s7 = inlined_call_operand.vmem [shape: f32[1,32], index: 7, kind: input, shape index: {}]
  %s8 = inlined_call_operand.hbm [shape: f32[16,32], index: 8, kind: output, shape index: {}]
  %s9 = sld [smem:[#allocation0]]
  $region70: #{tpu_custom_call.1} parent=0
    _
  %s11 = ssub.s32 1, %s9
  %s12 = scalar_select 0, %s11, %s9
  $region1: #{tpu_custom_call.1} parent=0
    #allocation3 [shape = 'u8[8192]{0}', space=vmem, size = 0x2000, scoped, tag = 'input window, operand 0, single buffered']
    #allocation4 [shape = 's32[1]{0}', space=sflag, size = 0x4, scoped, tag = 'scoped memory for tpu_custom_call.1']
    #allocation5 [shape = 's32[1]{0}', space=sflag, size = 0x4, scoped, tag = 'scoped memory for tpu_custom_call.1']
    #allocation6 [shape = 'u8[8192]{0}', space=vmem, size = 0x2000, scoped, tag = 'input window, operand 1, single buffered']
    #allocation7 [shape = 's32[1]{0}', space=sflag, size = 0x4, scoped, tag = 'scoped memory for tpu_custom_call.1']
    #allocation8 [shape = 'u8[8192]{0}', space=vmem, size = 0x2000, scoped, tag = 'input window, operand 2, single buffered']
    #allocation9 [shape = 'u8[16384]{0}', space=vmem, size = 0x4000, scoped, tag = 'input window, operand 3, single buffered']
    #allocation10 [shape = 's32[1]{0}', space=sflag, size = 0x4, scoped, tag = 'scoped memory for tpu_custom_call.1']
    #allocation11 [shape = 'u8[16384]{0}', space=vmem, size = 0x4000, scoped, tag = 'input window, operand 4, single buffered']
    #allocation12 [shape = 'u8[16384]{0}', space=vmem, size = 0x4000, scoped, tag = 'input window, operand 5, single buffered']
    #allocation13 [shape = 's32[1]{0}', space=sflag, size = 0x4, scoped, tag = 'scoped memory for tpu_custom_call.1']
    #allocation14 [shape = 'u8[16384]{0}', space=vmem, size = 0x4000, scoped, tag = 'input window, operand 6, single buffered']
    #allocation15 [shape = 'u8[8192]{0}', space=vmem, size = 0x2000, scoped, tag = 'output window, operand 0, single buffered']
    %13 = vsyncpa [#allocation4], 0
    %14 = vsyncpa [#allocation7], 0
    %15 = vsyncpa [#allocation10], 0
    %16 = vsyncpa [#allocation13], 0
    %17 = vsyncpa [#allocation5], 0
    // Predicated region
    $region2: #{tpu_custom_call.1} parent=1 // pred_check
      _
    $region3: #{tpu_custom_call.1} parent=1 // pred_check_branch
      %19 = sbr.rel (0) target = $region5
    $region4: #{tpu_custom_call.1} parent=1 // pred_region
      %s21 = ssub.s32 256, 256
      %22 = vsyncadd [#allocation4], %s21
      %s23 = sshll.u32 [#allocation3], 4
      %s24 = int_to_ptr.vmem [resolvable:$true] %s23
      %29 = dma.hbm_to_vmem [thread:$0]  %s0, 256, %s24, [#allocation4], 128, 128, 8
    $region5: #{tpu_custom_call.1} parent=1 // pred_fallthru
      _
    // Predicated region
    $region6: #{tpu_custom_call.1} parent=1 // pred_check
      _
    $region7: #{tpu_custom_call.1} parent=1 // pred_check_branch
      %31 = sbr.rel (0) target = $region9
    $region8: #{tpu_custom_call.1} parent=1 // pred_region
      %s33 = ssub.s32 256, 256
      %34 = vsyncadd [#allocation7], %s33
      %s35 = sshll.u32 [#allocation6], 4
      %s36 = int_to_ptr.vmem [resolvable:$true] %s35
      %41 = dma.hbm_to_vmem [thread:$0]  %s1, 256, %s36, [#allocation7], 128, 128, 8
    $region9: #{tpu_custom_call.1} parent=1 // pred_fallthru
      _
    // Predicated region
    $region10: #{tpu_custom_call.1} parent=1 // pred_check
      _
    $region11: #{tpu_custom_call.1} parent=1 // pred_check_branch
      %43 = sbr.rel (0) target = $region13
    $region12: #{tpu_custom_call.1} parent=1 // pred_region
      %s45 = ssub.s32 256, 256
      %46 = vsyncadd [#allocation7], %s45
      %s47 = sshll.u32 [#allocation8], 4
      %s48 = int_to_ptr.vmem [resolvable:$true] %s47
      %53 = dma.hbm_to_vmem [thread:$0]  %s2, 256, %s48, [#allocation7], 128, 128, 8
    $region13: #{tpu_custom_call.1} parent=1 // pred_fallthru
      _
    // Predicated region
    $region14: #{tpu_custom_call.1} parent=1 // pred_check
      _
    $region15: #{tpu_custom_call.1} parent=1 // pred_check_branch
      %55 = sbr.rel (0) target = $region17
    $region16: #{tpu_custom_call.1} parent=1 // pred_region
      %s57 = ssub.s32 512, 512
      %58 = vsyncadd [#allocation10], %s57
      %s59 = sshll.u32 [#allocation9], 4
      %s60 = int_to_ptr.vmem [resolvable:$true] %s59
      %65 = dma.hbm_to_vmem [thread:$0]  %s3, 512, %s60, [#allocation10], 128, 128, 8
    $region17: #{tpu_custom_call.1} parent=1 // pred_fallthru
      _
    // Predicated region
    $region18: #{tpu_custom_call.1} parent=1 // pred_check
      _
    $region19: #{tpu_custom_call.1} parent=1 // pred_check_branch
      %67 = sbr.rel (0) target = $region21
    $region20: #{tpu_custom_call.1} parent=1 // pred_region
      %s69 = ssub.s32 512, 512
      %70 = vsyncadd [#allocation10], %s69
      %s71 = sshll.u32 [#allocation11], 4
      %s72 = int_to_ptr.vmem [resolvable:$true] %s71
      %77 = dma.hbm_to_vmem [thread:$0]  %s4, 512, %s72, [#allocation10], 128, 128, 8
    $region21: #{tpu_custom_call.1} parent=1 // pred_fallthru
      _
    // Predicated region
    $region22: #{tpu_custom_call.1} parent=1 // pred_check
      _
    $region23: #{tpu_custom_call.1} parent=1 // pred_check_branch
      %79 = sbr.rel (0) target = $region25
    $region24: #{tpu_custom_call.1} parent=1 // pred_region
      %s81 = ssub.s32 512, 512
      %82 = vsyncadd [#allocation13], %s81
      %s83 = sshll.u32 [#allocation12], 4
      %s84 = int_to_ptr.vmem [resolvable:$true] %s83
      %89 = dma.hbm_to_vmem [thread:$0]  %s5, 512, %s84, [#allocation13], 128, 128, 8
    $region25: #{tpu_custom_call.1} parent=1 // pred_fallthru
      _
    // Predicated region
    $region26: #{tpu_custom_call.1} parent=1 // pred_check
      _
    $region27: #{tpu_custom_call.1} parent=1 // pred_check_branch
      %91 = sbr.rel (0) target = $region29
    $region28: #{tpu_custom_call.1} parent=1 // pred_region
      %s93 = ssub.s32 512, 512
      %94 = vsyncadd [#allocation13], %s93
      %s95 = sshll.u32 [#allocation14], 4
      %s96 = int_to_ptr.vmem [resolvable:$true] %s95
      %101 = dma.hbm_to_vmem [thread:$0]  %s6, 512, %s96, [#allocation13], 128, 128, 8
    $region29: #{tpu_custom_call.1} parent=1 // pred_fallthru
      _
    // Predicated region
    $region30: #{tpu_custom_call.1} parent=1 // pred_check
      _
    $region31: #{tpu_custom_call.1} parent=1 // pred_check_branch
      %103 = sbr.rel (0) target = $region33
    $region32: #{tpu_custom_call.1} parent=1 // pred_region
      _
    $region33: #{tpu_custom_call.1} parent=1 // pred_fallthru
      _
    // Predicated region
    $region34: #{tpu_custom_call.1} parent=1 // pred_check
      _
    $region35: #{tpu_custom_call.1} parent=1 // pred_check_branch
      %105 = sbr.rel (0) target = $region37
    $region36: #{tpu_custom_call.1} parent=1 // pred_region
      %106 = dma.done [#allocation4], 256
    $region37: #{tpu_custom_call.1} parent=1 // pred_fallthru
      _
    // Predicated region
    $region38: #{tpu_custom_call.1} parent=1 // pred_check
      _
    $region39: #{tpu_custom_call.1} parent=1 // pred_check_branch
      %108 = sbr.rel (0) target = $region41
    $region40: #{tpu_custom_call.1} parent=1 // pred_region
      %109 = dma.done [#allocation7], 256
    $region41: #{tpu_custom_call.1} parent=1 // pred_fallthru
      _
    // Predicated region
    $region42: #{tpu_custom_call.1} parent=1 // pred_check
      _
    $region43: #{tpu_custom_call.1} parent=1 // pred_check_branch
      %111 = sbr.rel (0) target = $region45
    $region44: #{tpu_custom_call.1} parent=1 // pred_region
      %112 = dma.done [#allocation7], 256
    $region45: #{tpu_custom_call.1} parent=1 // pred_fallthru
      _
    // Predicated region
    $region46: #{tpu_custom_call.1} parent=1 // pred_check
      _
    $region47: #{tpu_custom_call.1} parent=1 // pred_check_branch
      %114 = sbr.rel (0) target = $region49
    $region48: #{tpu_custom_call.1} parent=1 // pred_region
      %115 = dma.done [#allocation10], 512
    $region49: #{tpu_custom_call.1} parent=1 // pred_fallthru
      _
    // Predicated region
    $region50: #{tpu_custom_call.1} parent=1 // pred_check
      _
    $region51: #{tpu_custom_call.1} parent=1 // pred_check_branch
      %117 = sbr.rel (0) target = $region53
    $region52: #{tpu_custom_call.1} parent=1 // pred_region
      %118 = dma.done [#allocation10], 512
    $region53: #{tpu_custom_call.1} parent=1 // pred_fallthru
      _
    // Predicated region
    $region54: #{tpu_custom_call.1} parent=1 // pred_check
      _
    $region55: #{tpu_custom_call.1} parent=1 // pred_check_branch
      %120 = sbr.rel (0) target = $region57
    $region56: #{tpu_custom_call.1} parent=1 // pred_region
      %121 = dma.done [#allocation13], 512
    $region57: #{tpu_custom_call.1} parent=1 // pred_fallthru
      _
    // Predicated region
    $region58: #{tpu_custom_call.1} parent=1 // pred_check
      _
    $region59: #{tpu_custom_call.1} parent=1 // pred_check_branch
      %123 = sbr.rel (0) target = $region61
    $region60: #{tpu_custom_call.1} parent=1 // pred_region
      %124 = dma.done [#allocation13], 512
    $region61: #{tpu_custom_call.1} parent=1 // pred_fallthru
      _
    %v125 = vld [vmem:[#allocation3] sm:$0xff]
    %v126 = vld [vmem:[#allocation3 + $0x8] sm:$0xff]
    %v127 = vld [vmem:[#allocation9] sm:$0xff]
    %v128 = vld [vmem:[#allocation9 + $0x8] sm:$0xff]
    %v129 = vld [vmem:[#allocation9 + $0x10] sm:$0xff]
    %v130 = vld [vmem:[#allocation9 + $0x18] sm:$0xff]
    %vm131 = vcmask 261120
    %v133 = vsel %vm131, %v125, 0
    %v136 = vsel %vm131, %v126, 0
    %138 = vmatprep.subr.mxu0 0.0
    %139 = vmatpush1.msra.mxu0 %v127
    %140 = vmatprep.subr.mxu0 0.0
    %141 = vmatpush1.msra.mxu0 %v128
    %142 = vmatprep.subr.mxu0 0.0
    %143 = vmatpush1.msra.mxu0 %v129
    %144 = vmatprep.subr.mxu0 0.0
    %145 = vmatpush1.msra.mxu0 %v130
    %146 = vmatprep.subr.mxu0 0.0
    %147 = vmatpush1.msra.mxu0 0.0
    %148 = vmatprep.subr.mxu0 0.0
    %149 = vmatpush1.msra.mxu0 0.0
    %150 = vmatprep.subr.mxu0 0.0
    %151 = vmatpush1.msra.mxu0 0.0
    %152 = vmatprep.subr.mxu0 0.0
    %153 = vmatpush1.msra.mxu0 0.0
    %154 = vmatprep.subr.mxu0 0.0
    %155 = vmatpush1.msra.mxu0 0.0
    %156 = vmatprep.subr.mxu0 0.0
    %157 = vmatpush1.msra.mxu0 0.0
    %158 = vmatprep.subr.mxu0 0.0
    %159 = vmatpush1.msra.mxu0 0.0
    %160 = vmatprep.subr.mxu0 0.0
    %161 = vmatpush1.msra.mxu0 0.0
    %162 = vmatprep.subr.mxu0 0.0
    %163 = vmatpush1.msra.mxu0 0.0
    %164 = vmatprep.subr.mxu0 0.0
    %165 = vmatpush1.msra.mxu0 0.0
    %166 = vmatprep.subr.mxu0 0.0
    %167 = vmatpush1.msra.mxu0 0.0
    %168 = vmatprep.subr.mxu0 0.0
    %169 = vmatpush1.msra.mxu0 0.0
    %170 = vmatprep.subr.mxu0 0.0
    %171 = vmatpush1.msra.mxu0 0.0
    %172 = vmatprep.subr.mxu0 0.0
    %173 = vmatpush1.msra.mxu0 0.0
    %174 = vmatprep.subr.mxu0 0.0
    %175 = vmatpush1.msra.mxu0 0.0
    %176 = vmatprep.subr.mxu0 0.0
    %177 = vmatpush1.msra.mxu0 0.0
    %178 = vmatprep.subr.mxu0 0.0
    %179 = vmatpush1.msra.mxu0 0.0
    %180 = vmatprep.subr.mxu0 0.0
    %181 = vmatpush1.msra.mxu0 0.0
    %182 = vmatprep.subr.mxu0 0.0
    %183 = vmatpush1.msra.mxu0 0.0
    %184 = vmatprep.subr.mxu0 0.0
    %185 = vmatpush1.msra.mxu0 0.0
    %186 = vmatprep.subr.mxu0 0.0
    %187 = vmatpush1.msra.mxu0 0.0
    %188 = vmatprep.subr.mxu0 0.0
    %189 = vmatpush1.msra.mxu0 0.0
    %190 = vmatprep.subr.mxu0 0.0
    %191 = vmatpush1.msra.mxu0 0.0
    %192 = vmatprep.subr.mxu0 0.0
    %193 = vmatpush1.msra.mxu0 0.0
    %194 = vmatprep.subr.mxu0 0.0
    %195 = vmatpush1.msra.mxu0 0.0
    %196 = vmatprep.subr.mxu0 0.0
    %197 = vmatpush1.msra.mxu0 0.0
    %198 = vmatprep.subr.mxu0 0.0
    %199 = vmatpush1.msra.mxu0 0.0
    %200 = vmatprep.subr.mxu0 0.0
    %201 = vmatpush1.msra.mxu0 0.0
    %202 = vmatprep.mubr.f32.mxu0 0.0
    %203 = vmatmul.mubr.f32.gmra.mrb[0].mxu0 %v133
    %v204 = vpop.f32.mrb[0].mxu0
    %v205 = vadd.f32 0.0, %v204
    %v206 = vpop.f32.mrb[0].mxu0
    %207 = vmatprep.mubr.f32.mxu0 0.0
    %208 = vmatmul.mubr.f32.gmra.mrb[0].mxu0 %v136
    %v209 = vpop.f32.mrb[0].mxu0
    %v210 = vadd.f32 0.0, %v209
    %v211 = vpop.f32.mrb[0].mxu0
    %212 = vdwg.mxu0
    %v213 = vld [vmem:[#allocation6] sm:$0xff]
    %v214 = vld [vmem:[#allocation6 + $0x8] sm:$0xff]
    %v215 = vld [vmem:[#allocation11] sm:$0xff]
    %v216 = vld [vmem:[#allocation11 + $0x8] sm:$0xff]
    %v217 = vld [vmem:[#allocation11 + $0x10] sm:$0xff]
    %v218 = vld [vmem:[#allocation11 + $0x18] sm:$0xff]
    %v220 = vsel %vm131, %v213, 0
    %v223 = vsel %vm131, %v214, 0
    %225 = vmatprep.subr.mxu0 0.0
    %226 = vmatpush1.msra.mxu0 %v215
    %227 = vmatprep.subr.mxu0 0.0
    %228 = vmatpush1.msra.mxu0 %v216
    %229 = vmatprep.subr.mxu0 0.0
    %230 = vmatpush1.msra.mxu0 %v217
    %231 = vmatprep.subr.mxu0 0.0
    %232 = vmatpush1.msra.mxu0 %v218
    %233 = vmatprep.subr.mxu0 0.0
    %234 = vmatpush1.msra.mxu0 0.0
    %235 = vmatprep.subr.mxu0 0.0
    %236 = vmatpush1.msra.mxu0 0.0
    %237 = vmatprep.subr.mxu0 0.0
    %238 = vmatpush1.msra.mxu0 0.0
    %239 = vmatprep.subr.mxu0 0.0
    %240 = vmatpush1.msra.mxu0 0.0
    %241 = vmatprep.subr.mxu0 0.0
    %242 = vmatpush1.msra.mxu0 0.0
    %243 = vmatprep.subr.mxu0 0.0
    %244 = vmatpush1.msra.mxu0 0.0
    %245 = vmatprep.subr.mxu0 0.0
    %246 = vmatpush1.msra.mxu0 0.0
    %247 = vmatprep.subr.mxu0 0.0
    %248 = vmatpush1.msra.mxu0 0.0
    %249 = vmatprep.subr.mxu0 0.0
    %250 = vmatpush1.msra.mxu0 0.0
    %251 = vmatprep.subr.mxu0 0.0
    %252 = vmatpush1.msra.mxu0 0.0
    %253 = vmatprep.subr.mxu0 0.0
    %254 = vmatpush1.msra.mxu0 0.0
    %255 = vmatprep.subr.mxu0 0.0
    %256 = vmatpush1.msra.mxu0 0.0
    %257 = vmatprep.subr.mxu0 0.0
    %258 = vmatpush1.msra.mxu0 0.0
    %259 = vmatprep.subr.mxu0 0.0
    %260 = vmatpush1.msra.mxu0 0.0
    %261 = vmatprep.subr.mxu0 0.0
    %262 = vmatpush1.msra.mxu0 0.0
    %263 = vmatprep.subr.mxu0 0.0
    %264 = vmatpush1.msra.mxu0 0.0
    %265 = vmatprep.subr.mxu0 0.0
    %266 = vmatpush1.msra.mxu0 0.0
    %267 = vmatprep.subr.mxu0 0.0
    %268 = vmatpush1.msra.mxu0 0.0
    %269 = vmatprep.subr.mxu0 0.0
    %270 = vmatpush1.msra.mxu0 0.0
    %271 = vmatprep.subr.mxu0 0.0
    %272 = vmatpush1.msra.mxu0 0.0
    %273 = vmatprep.subr.mxu0 0.0
    %274 = vmatpush1.msra.mxu0 0.0
    %275 = vmatprep.subr.mxu0 0.0
    %276 = vmatpush1.msra.mxu0 0.0
    %277 = vmatprep.subr.mxu0 0.0
    %278 = vmatpush1.msra.mxu0 0.0
    %279 = vmatprep.subr.mxu0 0.0
    %280 = vmatpush1.msra.mxu0 0.0
    %281 = vmatprep.subr.mxu0 0.0
    %282 = vmatpush1.msra.mxu0 0.0
    %283 = vmatprep.subr.mxu0 0.0
    %284 = vmatpush1.msra.mxu0 0.0
    %285 = vmatprep.subr.mxu0 0.0
    %286 = vmatpush1.msra.mxu0 0.0
    %287 = vmatprep.subr.mxu0 0.0
    %288 = vmatpush1.msra.mxu0 0.0
    %289 = vmatprep.mubr.f32.mxu0 0.0
    %290 = vmatmul.mubr.f32.gmra.mrb[0].mxu0 %v220
    %v291 = vpop.f32.mrb[0].mxu0
    %v292 = vadd.f32 0.0, %v291
    %v293 = vpop.f32.mrb[0].mxu0
    %294 = vmatprep.mubr.f32.mxu0 0.0
    %295 = vmatmul.mubr.f32.gmra.mrb[0].mxu0 %v223
    %v296 = vpop.f32.mrb[0].mxu0
    %v297 = vadd.f32 0.0, %v296
    %v298 = vpop.f32.mrb[0].mxu0
    %299 = vdwg.mxu0
    %v300 = vld [vmem:[#allocation8] sm:$0xff]
    %v301 = vld [vmem:[#allocation8 + $0x8] sm:$0xff]
    %v302 = vld [vmem:[#allocation12] sm:$0xff]
    %v303 = vld [vmem:[#allocation12 + $0x8] sm:$0xff]
    %v304 = vld [vmem:[#allocation12 + $0x10] sm:$0xff]
    %v305 = vld [vmem:[#allocation12 + $0x18] sm:$0xff]
    %v307 = vsel %vm131, %v300, 0
    %v310 = vsel %vm131, %v301, 0
    %312 = vmatprep.subr.mxu0 0.0
    %313 = vmatpush1.msra.mxu0 %v302
    %314 = vmatprep.subr.mxu0 0.0
    %315 = vmatpush1.msra.mxu0 %v303
    %316 = vmatprep.subr.mxu0 0.0
    %317 = vmatpush1.msra.mxu0 %v304
    %318 = vmatprep.subr.mxu0 0.0
    %319 = vmatpush1.msra.mxu0 %v305
    %320 = vmatprep.subr.mxu0 0.0
    %321 = vmatpush1.msra.mxu0 0.0
    %322 = vmatprep.subr.mxu0 0.0
    %323 = vmatpush1.msra.mxu0 0.0
    %324 = vmatprep.subr.mxu0 0.0
    %325 = vmatpush1.msra.mxu0 0.0
    %326 = vmatprep.subr.mxu0 0.0
    %327 = vmatpush1.msra.mxu0 0.0
    %328 = vmatprep.subr.mxu0 0.0
    %329 = vmatpush1.msra.mxu0 0.0
    %330 = vmatprep.subr.mxu0 0.0
    %331 = vmatpush1.msra.mxu0 0.0
    %332 = vmatprep.subr.mxu0 0.0
    %333 = vmatpush1.msra.mxu0 0.0
    %334 = vmatprep.subr.mxu0 0.0
    %335 = vmatpush1.msra.mxu0 0.0
    %336 = vmatprep.subr.mxu0 0.0
    %337 = vmatpush1.msra.mxu0 0.0
    %338 = vmatprep.subr.mxu0 0.0
    %339 = vmatpush1.msra.mxu0 0.0
    %340 = vmatprep.subr.mxu0 0.0
    %341 = vmatpush1.msra.mxu0 0.0
    %342 = vmatprep.subr.mxu0 0.0
    %343 = vmatpush1.msra.mxu0 0.0
    %344 = vmatprep.subr.mxu0 0.0
    %345 = vmatpush1.msra.mxu0 0.0
    %346 = vmatprep.subr.mxu0 0.0
    %347 = vmatpush1.msra.mxu0 0.0
    %348 = vmatprep.subr.mxu0 0.0
    %349 = vmatpush1.msra.mxu0 0.0
    %350 = vmatprep.subr.mxu0 0.0
    %351 = vmatpush1.msra.mxu0 0.0
    %352 = vmatprep.subr.mxu0 0.0
    %353 = vmatpush1.msra.mxu0 0.0
    %354 = vmatprep.subr.mxu0 0.0
    %355 = vmatpush1.msra.mxu0 0.0
    %356 = vmatprep.subr.mxu0 0.0
    %357 = vmatpush1.msra.mxu0 0.0
    %358 = vmatprep.subr.mxu0 0.0
    %359 = vmatpush1.msra.mxu0 0.0
    %360 = vmatprep.subr.mxu0 0.0
    %361 = vmatpush1.msra.mxu0 0.0
    %362 = vmatprep.subr.mxu0 0.0
    %363 = vmatpush1.msra.mxu0 0.0
    %364 = vmatprep.subr.mxu0 0.0
    %365 = vmatpush1.msra.mxu0 0.0
    %366 = vmatprep.subr.mxu0 0.0
    %367 = vmatpush1.msra.mxu0 0.0
    %368 = vmatprep.subr.mxu0 0.0
    %369 = vmatpush1.msra.mxu0 0.0
    %370 = vmatprep.subr.mxu0 0.0
    %371 = vmatpush1.msra.mxu0 0.0
    %372 = vmatprep.subr.mxu0 0.0
    %373 = vmatpush1.msra.mxu0 0.0
    %374 = vmatprep.subr.mxu0 0.0
    %375 = vmatpush1.msra.mxu0 0.0
    %376 = vmatprep.mubr.f32.mxu0 0.0
    %377 = vmatmul.mubr.f32.gmra.mrb[0].mxu0 %v307
    %v378 = vpop.f32.mrb[0].mxu0
    %v379 = vadd.f32 0.0, %v378
    %v380 = vpop.f32.mrb[0].mxu0
    %381 = vmatprep.mubr.f32.mxu0 0.0
    %382 = vmatmul.mubr.f32.gmra.mrb[0].mxu0 %v310
    %v383 = vpop.f32.mrb[0].mxu0
    %v384 = vadd.f32 0.0, %v383
    %v385 = vpop.f32.mrb[0].mxu0
    %386 = vdwg.mxu0
    %vm387 = vcmask 64512
    %v389 = vsel %vm387, %v379, 0
    %v392 = vsel %vm387, %v292, 0
    %394 = vmatprep.subr.mxu0 0.0
    %395 = vmatpush1.xpose.msra.mxu0 %v392
    %396 = vmatprep.subr.mxu0 0.0
    %397 = vmatpush1.xpose.msra.mxu0 0.0
    %398 = vmatprep.subr.mxu0 0.0
    %399 = vmatpush1.xpose.msra.mxu0 0.0
    %400 = vmatprep.subr.mxu0 0.0
    %401 = vmatpush1.xpose.msra.mxu0 0.0
    %402 = vmatprep.subr.mxu0 0.0
    %403 = vmatpush1.xpose.msra.mxu0 0.0
    %404 = vmatprep.subr.mxu0 0.0
    %405 = vmatpush1.xpose.msra.mxu0 0.0
    %406 = vmatprep.subr.mxu0 0.0
    %407 = vmatpush1.xpose.msra.mxu0 0.0
    %408 = vmatprep.subr.mxu0 0.0
    %409 = vmatpush1.xpose.msra.mxu0 0.0
    %410 = vmatprep.subr.mxu0 0.0
    %411 = vmatpush1.xpose.msra.mxu0 0.0
    %412 = vmatprep.subr.mxu0 0.0
    %413 = vmatpush1.xpose.msra.mxu0 0.0
    %414 = vmatprep.subr.mxu0 0.0
    %415 = vmatpush1.xpose.msra.mxu0 0.0
    %416 = vmatprep.subr.mxu0 0.0
    %417 = vmatpush1.xpose.msra.mxu0 0.0
    %418 = vmatprep.subr.mxu0 0.0
    %419 = vmatpush1.xpose.msra.mxu0 0.0
    %420 = vmatprep.subr.mxu0 0.0
    %421 = vmatpush1.xpose.msra.mxu0 0.0
    %422 = vmatprep.subr.mxu0 0.0
    %423 = vmatpush1.xpose.msra.mxu0 0.0
    %424 = vmatprep.subr.mxu0 0.0
    %425 = vmatpush1.xpose.msra.mxu0 0.0
    %426 = vmatprep.subr.mxu0 0.0
    %427 = vmatpush1.xpose.msra.mxu0 0.0
    %428 = vmatprep.subr.mxu0 0.0
    %429 = vmatpush1.xpose.msra.mxu0 0.0
    %430 = vmatprep.subr.mxu0 0.0
    %431 = vmatpush1.xpose.msra.mxu0 0.0
    %432 = vmatprep.subr.mxu0 0.0
    %433 = vmatpush1.xpose.msra.mxu0 0.0
    %434 = vmatprep.subr.mxu0 0.0
    %435 = vmatpush1.xpose.msra.mxu0 0.0
    %436 = vmatprep.subr.mxu0 0.0
    %437 = vmatpush1.xpose.msra.mxu0 0.0
    %438 = vmatprep.subr.mxu0 0.0
    %439 = vmatpush1.xpose.msra.mxu0 0.0
    %440 = vmatprep.subr.mxu0 0.0
    %441 = vmatpush1.xpose.msra.mxu0 0.0
    %442 = vmatprep.subr.mxu0 0.0
    %443 = vmatpush1.xpose.msra.mxu0 0.0
    %444 = vmatprep.subr.mxu0 0.0
    %445 = vmatpush1.xpose.msra.mxu0 0.0
    %446 = vmatprep.subr.mxu0 0.0
    %447 = vmatpush1.xpose.msra.mxu0 0.0
    %448 = vmatprep.subr.mxu0 0.0
    %449 = vmatpush1.xpose.msra.mxu0 0.0
    %450 = vmatprep.subr.mxu0 0.0
    %451 = vmatpush1.xpose.msra.mxu0 0.0
    %452 = vmatprep.subr.mxu0 0.0
    %453 = vmatpush1.xpose.msra.mxu0 0.0
    %454 = vmatprep.subr.mxu0 0.0
    %455 = vmatpush1.xpose.msra.mxu0 0.0
    %456 = vmatprep.subr.mxu0 0.0
    %457 = vmatpush1.xpose.msra.mxu0 0.0
    %458 = vmatprep.mubr.f32.mxu0 0.0
    %459 = vmatmul.mubr.f32.gmra.mrb[0].mxu0 %v389
    %v460 = vpop.f32.mrb[0].mxu0
    %v461 = vadd.f32 0.0, %v460
    %v462 = vpop.f32.mrb[0].mxu0
    %463 = vdwg.mxu0
    %v465 = vsel %vm387, %v384, 0
    %v468 = vsel %vm387, %v297, 0
    %470 = vmatprep.subr.mxu0 0.0
    %471 = vmatpush1.xpose.msra.mxu0 %v468
    %472 = vmatprep.subr.mxu0 0.0
    %473 = vmatpush1.xpose.msra.mxu0 0.0
    %474 = vmatprep.subr.mxu0 0.0
    %475 = vmatpush1.xpose.msra.mxu0 0.0
    %476 = vmatprep.subr.mxu0 0.0
    %477 = vmatpush1.xpose.msra.mxu0 0.0
    %478 = vmatprep.subr.mxu0 0.0
    %479 = vmatpush1.xpose.msra.mxu0 0.0
    %480 = vmatprep.subr.mxu0 0.0
    %481 = vmatpush1.xpose.msra.mxu0 0.0
    %482 = vmatprep.subr.mxu0 0.0
    %483 = vmatpush1.xpose.msra.mxu0 0.0
    %484 = vmatprep.subr.mxu0 0.0
    %485 = vmatpush1.xpose.msra.mxu0 0.0
    %486 = vmatprep.subr.mxu0 0.0
    %487 = vmatpush1.xpose.msra.mxu0 0.0
    %488 = vmatprep.subr.mxu0 0.0
    %489 = vmatpush1.xpose.msra.mxu0 0.0
    %490 = vmatprep.subr.mxu0 0.0
    %491 = vmatpush1.xpose.msra.mxu0 0.0
    %492 = vmatprep.subr.mxu0 0.0
    %493 = vmatpush1.xpose.msra.mxu0 0.0
    %494 = vmatprep.subr.mxu0 0.0
    %495 = vmatpush1.xpose.msra.mxu0 0.0
    %496 = vmatprep.subr.mxu0 0.0
    %497 = vmatpush1.xpose.msra.mxu0 0.0
    %498 = vmatprep.subr.mxu0 0.0
    %499 = vmatpush1.xpose.msra.mxu0 0.0
    %500 = vmatprep.subr.mxu0 0.0
    %501 = vmatpush1.xpose.msra.mxu0 0.0
    %502 = vmatprep.subr.mxu0 0.0
    %503 = vmatpush1.xpose.msra.mxu0 0.0
    %504 = vmatprep.subr.mxu0 0.0
    %505 = vmatpush1.xpose.msra.mxu0 0.0
    %506 = vmatprep.subr.mxu0 0.0
    %507 = vmatpush1.xpose.msra.mxu0 0.0
    %508 = vmatprep.subr.mxu0 0.0
    %509 = vmatpush1.xpose.msra.mxu0 0.0
    %510 = vmatprep.subr.mxu0 0.0
    %511 = vmatpush1.xpose.msra.mxu0 0.0
    %512 = vmatprep.subr.mxu0 0.0
    %513 = vmatpush1.xpose.msra.mxu0 0.0
    %514 = vmatprep.subr.mxu0 0.0
    %515 = vmatpush1.xpose.msra.mxu0 0.0
    %516 = vmatprep.subr.mxu0 0.0
    %517 = vmatpush1.xpose.msra.mxu0 0.0
    %518 = vmatprep.subr.mxu0 0.0
    %519 = vmatpush1.xpose.msra.mxu0 0.0
    %520 = vmatprep.subr.mxu0 0.0
    %521 = vmatpush1.xpose.msra.mxu0 0.0
    %522 = vmatprep.subr.mxu0 0.0
    %523 = vmatpush1.xpose.msra.mxu0 0.0
    %524 = vmatprep.subr.mxu0 0.0
    %525 = vmatpush1.xpose.msra.mxu0 0.0
    %526 = vmatprep.subr.mxu0 0.0
    %527 = vmatpush1.xpose.msra.mxu0 0.0
    %528 = vmatprep.subr.mxu0 0.0
    %529 = vmatpush1.xpose.msra.mxu0 0.0
    %530 = vmatprep.subr.mxu0 0.0
    %531 = vmatpush1.xpose.msra.mxu0 0.0
    %532 = vmatprep.subr.mxu0 0.0
    %533 = vmatpush1.xpose.msra.mxu0 0.0
    %534 = vmatprep.mubr.f32.mxu0 0.0
    %535 = vmatmul.mubr.f32.gmra.mrb[0].mxu0 %v465
    %v536 = vpop.f32.mrb[0].mxu0
    %v537 = vadd.f32 0.0, %v536
    %v538 = vpop.f32.mrb[0].mxu0
    %539 = vdwg.mxu0
    %v540 = vsel %vm387, %v461, -inf
    %541 = vmax.xlane.f32.xlu0 %v540
    %v542 = vpop.xlane.xlu0 %541
    %v543 = vsel %vm387, %v537, -inf
    %544 = vmax.xlane.f32.xlu0 %v543
    %v545 = vpop.xlane.xlu0 %544
    %v546 = vsub.f32 %v461, %v542
    %v547 = vsub.f32 %v537, %v545
    %v548 = vmul.f32 %v546, 1.442695
    %v549 = vpow.pop %v548
    %v550 = vmul.f32 %v547, 1.442695
    %v551 = vpow.pop %v550
    %v552 = vsel %vm387, %v549, 0.0
    %553 = vadd.xlane.f32.xlu0 %v552
    %v554 = vpop.xlane.xlu0 %553
    %v555 = vsel %vm387, %v551, 0.0
    %556 = vadd.xlane.f32.xlu0 %v555
    %v557 = vpop.xlane.xlu0 %556
    %v558 = vrcp.pop %v554
    %v559 = vrcp.pop %v557
    %v560 = vmul.f32 %v549, %v558
    %v561 = vmul.f32 %v551, %v559
    %v563 = vsel %vm387, %v560, 0
    %565 = vmatprep.subr.mxu0 0.0
    %566 = vmatpush1.msra.mxu0 %v205
    %567 = vmatprep.subr.mxu0 0.0
    %568 = vmatpush1.msra.mxu0 0.0
    %569 = vmatprep.subr.mxu0 0.0
    %570 = vmatpush1.msra.mxu0 0.0
    %571 = vmatprep.subr.mxu0 0.0
    %572 = vmatpush1.msra.mxu0 0.0
    %573 = vmatprep.subr.mxu0 0.0
    %574 = vmatpush1.msra.mxu0 0.0
    %575 = vmatprep.subr.mxu0 0.0
    %576 = vmatpush1.msra.mxu0 0.0
    %577 = vmatprep.subr.mxu0 0.0
    %578 = vmatpush1.msra.mxu0 0.0
    %579 = vmatprep.subr.mxu0 0.0
    %580 = vmatpush1.msra.mxu0 0.0
    %581 = vmatprep.subr.mxu0 0.0
    %582 = vmatpush1.msra.mxu0 0.0
    %583 = vmatprep.subr.mxu0 0.0
    %584 = vmatpush1.msra.mxu0 0.0
    %585 = vmatprep.subr.mxu0 0.0
    %586 = vmatpush1.msra.mxu0 0.0
    %587 = vmatprep.subr.mxu0 0.0
    %588 = vmatpush1.msra.mxu0 0.0
    %589 = vmatprep.subr.mxu0 0.0
    %590 = vmatpush1.msra.mxu0 0.0
    %591 = vmatprep.subr.mxu0 0.0
    %592 = vmatpush1.msra.mxu0 0.0
    %593 = vmatprep.subr.mxu0 0.0
    %594 = vmatpush1.msra.mxu0 0.0
    %595 = vmatprep.subr.mxu0 0.0
    %596 = vmatpush1.msra.mxu0 0.0
    %597 = vmatprep.subr.mxu0 0.0
    %598 = vmatpush1.msra.mxu0 0.0
    %599 = vmatprep.subr.mxu0 0.0
    %600 = vmatpush1.msra.mxu0 0.0
    %601 = vmatprep.subr.mxu0 0.0
    %602 = vmatpush1.msra.mxu0 0.0
    %603 = vmatprep.subr.mxu0 0.0
    %604 = vmatpush1.msra.mxu0 0.0
    %605 = vmatprep.subr.mxu0 0.0
    %606 = vmatpush1.msra.mxu0 0.0
    %607 = vmatprep.subr.mxu0 0.0
    %608 = vmatpush1.msra.mxu0 0.0
    %609 = vmatprep.subr.mxu0 0.0
    %610 = vmatpush1.msra.mxu0 0.0
    %611 = vmatprep.subr.mxu0 0.0
    %612 = vmatpush1.msra.mxu0 0.0
    %613 = vmatprep.subr.mxu0 0.0
    %614 = vmatpush1.msra.mxu0 0.0
    %615 = vmatprep.subr.mxu0 0.0
    %616 = vmatpush1.msra.mxu0 0.0
    %617 = vmatprep.subr.mxu0 0.0
    %618 = vmatpush1.msra.mxu0 0.0
    %619 = vmatprep.subr.mxu0 0.0
    %620 = vmatpush1.msra.mxu0 0.0
    %621 = vmatprep.subr.mxu0 0.0
    %622 = vmatpush1.msra.mxu0 0.0
    %623 = vmatprep.subr.mxu0 0.0
    %624 = vmatpush1.msra.mxu0 0.0
    %625 = vmatprep.subr.mxu0 0.0
    %626 = vmatpush1.msra.mxu0 0.0
    %627 = vmatprep.subr.mxu0 0.0
    %628 = vmatpush1.msra.mxu0 0.0
    %629 = vmatprep.mubr.f32.mxu0 0.0
    %630 = vmatmul.mubr.f32.gmra.mrb[0].mxu0 %v563
    %v631 = vpop.f32.mrb[0].mxu0
    %v632 = vadd.f32 0.0, %v631
    %v633 = vpop.f32.mrb[0].mxu0
    %634 = vdwg.mxu0
    %v636 = vsel %vm387, %v561, 0
    %638 = vmatprep.subr.mxu0 0.0
    %639 = vmatpush1.msra.mxu0 %v210
    %640 = vmatprep.subr.mxu0 0.0
    %641 = vmatpush1.msra.mxu0 0.0
    %642 = vmatprep.subr.mxu0 0.0
    %643 = vmatpush1.msra.mxu0 0.0
    %644 = vmatprep.subr.mxu0 0.0
    %645 = vmatpush1.msra.mxu0 0.0
    %646 = vmatprep.subr.mxu0 0.0
    %647 = vmatpush1.msra.mxu0 0.0
    %648 = vmatprep.subr.mxu0 0.0
    %649 = vmatpush1.msra.mxu0 0.0
    %650 = vmatprep.subr.mxu0 0.0
    %651 = vmatpush1.msra.mxu0 0.0
    %652 = vmatprep.subr.mxu0 0.0
    %653 = vmatpush1.msra.mxu0 0.0
    %654 = vmatprep.subr.mxu0 0.0
    %655 = vmatpush1.msra.mxu0 0.0
    %656 = vmatprep.subr.mxu0 0.0
    %657 = vmatpush1.msra.mxu0 0.0
    %658 = vmatprep.subr.mxu0 0.0
    %659 = vmatpush1.msra.mxu0 0.0
    %660 = vmatprep.subr.mxu0 0.0
    %661 = vmatpush1.msra.mxu0 0.0
    %662 = vmatprep.subr.mxu0 0.0
    %663 = vmatpush1.msra.mxu0 0.0
    %664 = vmatprep.subr.mxu0 0.0
    %665 = vmatpush1.msra.mxu0 0.0
    %666 = vmatprep.subr.mxu0 0.0
    %667 = vmatpush1.msra.mxu0 0.0
    %668 = vmatprep.subr.mxu0 0.0
    %669 = vmatpush1.msra.mxu0 0.0
    %670 = vmatprep.subr.mxu0 0.0
    %671 = vmatpush1.msra.mxu0 0.0
    %672 = vmatprep.subr.mxu0 0.0
    %673 = vmatpush1.msra.mxu0 0.0
    %674 = vmatprep.subr.mxu0 0.0
    %675 = vmatpush1.msra.mxu0 0.0
    %676 = vmatprep.subr.mxu0 0.0
    %677 = vmatpush1.msra.mxu0 0.0
    %678 = vmatprep.subr.mxu0 0.0
    %679 = vmatpush1.msra.mxu0 0.0
    %680 = vmatprep.subr.mxu0 0.0
    %681 = vmatpush1.msra.mxu0 0.0
    %682 = vmatprep.subr.mxu0 0.0
    %683 = vmatpush1.msra.mxu0 0.0
    %684 = vmatprep.subr.mxu0 0.0
    %685 = vmatpush1.msra.mxu0 0.0
    %686 = vmatprep.subr.mxu0 0.0
    %687 = vmatpush1.msra.mxu0 0.0
    %688 = vmatprep.subr.mxu0 0.0
    %689 = vmatpush1.msra.mxu0 0.0
    %690 = vmatprep.subr.mxu0 0.0
    %691 = vmatpush1.msra.mxu0 0.0
    %692 = vmatprep.subr.mxu0 0.0
    %693 = vmatpush1.msra.mxu0 0.0
    %694 = vmatprep.subr.mxu0 0.0
    %695 = vmatpush1.msra.mxu0 0.0
    %696 = vmatprep.subr.mxu0 0.0
    %697 = vmatpush1.msra.mxu0 0.0
    %698 = vmatprep.subr.mxu0 0.0
    %699 = vmatpush1.msra.mxu0 0.0
    %700 = vmatprep.subr.mxu0 0.0
    %701 = vmatpush1.msra.mxu0 0.0
    %702 = vmatprep.mubr.f32.mxu0 0.0
    %703 = vmatmul.mubr.f32.gmra.mrb[0].mxu0 %v636
    %v704 = vpop.f32.mrb[0].mxu0
    %v705 = vadd.f32 0.0, %v704
    %v706 = vpop.f32.mrb[0].mxu0
    %707 = vdwg.mxu0
    %708 = vst.msk [vmem:[#allocation2] sm:$0xff] %vm387, %v632
    %709 = vst.msk [vmem:[#allocation2 + $0x8] sm:$0xff] %vm387, %v705
    %710 = vrot.lane.b32.xlu0 %v379, 120
    %v711 = vpop.permute.xlu0 %710
    %712 = vrot.lane.b32.xlu0 %v292, 120
    %v713 = vpop.permute.xlu0 %712
    %v714 = vsel %vm387, %v711, 0
    %v716 = vsel %vm387, %v713, 0
    %718 = vmatprep.subr.mxu0 0.0
    %719 = vmatpush1.xpose.msra.mxu0 %v716
    %720 = vmatprep.subr.mxu0 0.0
    %721 = vmatpush1.xpose.msra.mxu0 0.0
    %722 = vmatprep.subr.mxu0 0.0
    %723 = vmatpush1.xpose.msra.mxu0 0.0
    %724 = vmatprep.subr.mxu0 0.0
    %725 = vmatpush1.xpose.msra.mxu0 0.0
    %726 = vmatprep.subr.mxu0 0.0
    %727 = vmatpush1.xpose.msra.mxu0 0.0
    %728 = vmatprep.subr.mxu0 0.0
    %729 = vmatpush1.xpose.msra.mxu0 0.0
    %730 = vmatprep.subr.mxu0 0.0
    %731 = vmatpush1.xpose.msra.mxu0 0.0
    %732 = vmatprep.subr.mxu0 0.0
    %733 = vmatpush1.xpose.msra.mxu0 0.0
    %734 = vmatprep.subr.mxu0 0.0
    %735 = vmatpush1.xpose.msra.mxu0 0.0
    %736 = vmatprep.subr.mxu0 0.0
    %737 = vmatpush1.xpose.msra.mxu0 0.0
    %738 = vmatprep.subr.mxu0 0.0
    %739 = vmatpush1.xpose.msra.mxu0 0.0
    %740 = vmatprep.subr.mxu0 0.0
    %741 = vmatpush1.xpose.msra.mxu0 0.0
    %742 = vmatprep.subr.mxu0 0.0
    %743 = vmatpush1.xpose.msra.mxu0 0.0
    %744 = vmatprep.subr.mxu0 0.0
    %745 = vmatpush1.xpose.msra.mxu0 0.0
    %746 = vmatprep.subr.mxu0 0.0
    %747 = vmatpush1.xpose.msra.mxu0 0.0
    %748 = vmatprep.subr.mxu0 0.0
    %749 = vmatpush1.xpose.msra.mxu0 0.0
    %750 = vmatprep.subr.mxu0 0.0
    %751 = vmatpush1.xpose.msra.mxu0 0.0
    %752 = vmatprep.subr.mxu0 0.0
    %753 = vmatpush1.xpose.msra.mxu0 0.0
    %754 = vmatprep.subr.mxu0 0.0
    %755 = vmatpush1.xpose.msra.mxu0 0.0
    %756 = vmatprep.subr.mxu0 0.0
    %757 = vmatpush1.xpose.msra.mxu0 0.0
    %758 = vmatprep.subr.mxu0 0.0
    %759 = vmatpush1.xpose.msra.mxu0 0.0
    %760 = vmatprep.subr.mxu0 0.0
    %761 = vmatpush1.xpose.msra.mxu0 0.0
    %762 = vmatprep.subr.mxu0 0.0
    %763 = vmatpush1.xpose.msra.mxu0 0.0
    %764 = vmatprep.subr.mxu0 0.0
    %765 = vmatpush1.xpose.msra.mxu0 0.0
    %766 = vmatprep.subr.mxu0 0.0
    %767 = vmatpush1.xpose.msra.mxu0 0.0
    %768 = vmatprep.subr.mxu0 0.0
    %769 = vmatpush1.xpose.msra.mxu0 0.0
    %770 = vmatprep.subr.mxu0 0.0
    %771 = vmatpush1.xpose.msra.mxu0 0.0
    %772 = vmatprep.subr.mxu0 0.0
    %773 = vmatpush1.xpose.msra.mxu0 0.0
    %774 = vmatprep.subr.mxu0 0.0
    %775 = vmatpush1.xpose.msra.mxu0 0.0
    %776 = vmatprep.subr.mxu0 0.0
    %777 = vmatpush1.xpose.msra.mxu0 0.0
    %778 = vmatprep.subr.mxu0 0.0
    %779 = vmatpush1.xpose.msra.mxu0 0.0
    %780 = vmatprep.subr.mxu0 0.0
    %781 = vmatpush1.xpose.msra.mxu0 0.0
    %782 = vmatprep.mubr.f32.mxu0 0.0
    %783 = vmatmul.mubr.f32.gmra.mrb[0].mxu0 %v714
    %v784 = vpop.f32.mrb[0].mxu0
    %v785 = vadd.f32 0.0, %v784
    %v786 = vpop.f32.mrb[0].mxu0
    %787 = vdwg.mxu0
    %788 = vrot.lane.b32.xlu0 %v384, 120
    %v789 = vpop.permute.xlu0 %788
    %790 = vrot.lane.b32.xlu0 %v297, 120
    %v791 = vpop.permute.xlu0 %790
    %v792 = vsel %vm387, %v789, 0
    %v794 = vsel %vm387, %v791, 0
    %796 = vmatprep.subr.mxu0 0.0
    %797 = vmatpush1.xpose.msra.mxu0 %v794
    %798 = vmatprep.subr.mxu0 0.0
    %799 = vmatpush1.xpose.msra.mxu0 0.0
    %800 = vmatprep.subr.mxu0 0.0
    %801 = vmatpush1.xpose.msra.mxu0 0.0
    %802 = vmatprep.subr.mxu0 0.0
    %803 = vmatpush1.xpose.msra.mxu0 0.0
    %804 = vmatprep.subr.mxu0 0.0
    %805 = vmatpush1.xpose.msra.mxu0 0.0
    %806 = vmatprep.subr.mxu0 0.0
    %807 = vmatpush1.xpose.msra.mxu0 0.0
    %808 = vmatprep.subr.mxu0 0.0
    %809 = vmatpush1.xpose.msra.mxu0 0.0
    %810 = vmatprep.subr.mxu0 0.0
    %811 = vmatpush1.xpose.msra.mxu0 0.0
    %812 = vmatprep.subr.mxu0 0.0
    %813 = vmatpush1.xpose.msra.mxu0 0.0
    %814 = vmatprep.subr.mxu0 0.0
    %815 = vmatpush1.xpose.msra.mxu0 0.0
    %816 = vmatprep.subr.mxu0 0.0
    %817 = vmatpush1.xpose.msra.mxu0 0.0
    %818 = vmatprep.subr.mxu0 0.0
    %819 = vmatpush1.xpose.msra.mxu0 0.0
    %820 = vmatprep.subr.mxu0 0.0
    %821 = vmatpush1.xpose.msra.mxu0 0.0
    %822 = vmatprep.subr.mxu0 0.0
    %823 = vmatpush1.xpose.msra.mxu0 0.0
    %824 = vmatprep.subr.mxu0 0.0
    %825 = vmatpush1.xpose.msra.mxu0 0.0
    %826 = vmatprep.subr.mxu0 0.0
    %827 = vmatpush1.xpose.msra.mxu0 0.0
    %828 = vmatprep.subr.mxu0 0.0
    %829 = vmatpush1.xpose.msra.mxu0 0.0
    %830 = vmatprep.subr.mxu0 0.0
    %831 = vmatpush1.xpose.msra.mxu0 0.0
    %832 = vmatprep.subr.mxu0 0.0
    %833 = vmatpush1.xpose.msra.mxu0 0.0
    %834 = vmatprep.subr.mxu0 0.0
    %835 = vmatpush1.xpose.msra.mxu0 0.0
    %836 = vmatprep.subr.mxu0 0.0
    %837 = vmatpush1.xpose.msra.mxu0 0.0
    %838 = vmatprep.subr.mxu0 0.0
    %839 = vmatpush1.xpose.msra.mxu0 0.0
    %840 = vmatprep.subr.mxu0 0.0
    %841 = vmatpush1.xpose.msra.mxu0 0.0
    %842 = vmatprep.subr.mxu0 0.0
    %843 = vmatpush1.xpose.msra.mxu0 0.0
    %844 = vmatprep.subr.mxu0 0.0
    %845 = vmatpush1.xpose.msra.mxu0 0.0
    %846 = vmatprep.subr.mxu0 0.0
    %847 = vmatpush1.xpose.msra.mxu0 0.0
    %848 = vmatprep.subr.mxu0 0.0
    %849 = vmatpush1.xpose.msra.mxu0 0.0
    %850 = vmatprep.subr.mxu0 0.0
    %851 = vmatpush1.xpose.msra.mxu0 0.0
    %852 = vmatprep.subr.mxu0 0.0
    %853 = vmatpush1.xpose.msra.mxu0 0.0
    %854 = vmatprep.subr.mxu0 0.0
    %855 = vmatpush1.xpose.msra.mxu0 0.0
    %856 = vmatprep.subr.mxu0 0.0
    %857 = vmatpush1.xpose.msra.mxu0 0.0
    %858 = vmatprep.subr.mxu0 0.0
    %859 = vmatpush1.xpose.msra.mxu0 0.0
    %860 = vmatprep.mubr.f32.mxu0 0.0
    %861 = vmatmul.mubr.f32.gmra.mrb[0].mxu0 %v792
    %v862 = vpop.f32.mrb[0].mxu0
    %v863 = vadd.f32 0.0, %v862
    %v864 = vpop.f32.mrb[0].mxu0
    %865 = vdwg.mxu0
    %v866 = vsel %vm387, %v785, -inf
    %867 = vmax.xlane.f32.xlu0 %v866
    %v868 = vpop.xlane.xlu0 %867
    %v869 = vsel %vm387, %v863, -inf
    %870 = vmax.xlane.f32.xlu0 %v869
    %v871 = vpop.xlane.xlu0 %870
    %v872 = vsub.f32 %v785, %v868
    %v873 = vsub.f32 %v863, %v871
    %v874 = vmul.f32 %v872, 1.442695
    %v875 = vpow.pop %v874
    %v876 = vmul.f32 %v873, 1.442695
    %v877 = vpow.pop %v876
    %v878 = vsel %vm387, %v875, 0.0
    %879 = vadd.xlane.f32.xlu0 %v878
    %v880 = vpop.xlane.xlu0 %879
    %v881 = vsel %vm387, %v877, 0.0
    %882 = vadd.xlane.f32.xlu0 %v881
    %v883 = vpop.xlane.xlu0 %882
    %v884 = vrcp.pop %v880
    %v885 = vrcp.pop %v883
    %v886 = vmul.f32 %v875, %v884
    %v887 = vmul.f32 %v877, %v885
    %889 = vrot.lane.b32.xlu0 %v205, 120
    %v890 = vpop.permute.xlu0 %889
    %v893 = vsel %vm387, %v886, 0
    %895 = vmatprep.subr.mxu0 0.0
    %896 = vmatpush1.msra.mxu0 %v890
    %897 = vmatprep.subr.mxu0 0.0
    %898 = vmatpush1.msra.mxu0 0.0
    %899 = vmatprep.subr.mxu0 0.0
    %900 = vmatpush1.msra.mxu0 0.0
    %901 = vmatprep.subr.mxu0 0.0
    %902 = vmatpush1.msra.mxu0 0.0
    %903 = vmatprep.subr.mxu0 0.0
    %904 = vmatpush1.msra.mxu0 0.0
    %905 = vmatprep.subr.mxu0 0.0
    %906 = vmatpush1.msra.mxu0 0.0
    %907 = vmatprep.subr.mxu0 0.0
    %908 = vmatpush1.msra.mxu0 0.0
    %909 = vmatprep.subr.mxu0 0.0
    %910 = vmatpush1.msra.mxu0 0.0
    %911 = vmatprep.subr.mxu0 0.0
    %912 = vmatpush1.msra.mxu0 0.0
    %913 = vmatprep.subr.mxu0 0.0
    %914 = vmatpush1.msra.mxu0 0.0
    %915 = vmatprep.subr.mxu0 0.0
    %916 = vmatpush1.msra.mxu0 0.0
    %917 = vmatprep.subr.mxu0 0.0
    %918 = vmatpush1.msra.mxu0 0.0
    %919 = vmatprep.subr.mxu0 0.0
    %920 = vmatpush1.msra.mxu0 0.0
    %921 = vmatprep.subr.mxu0 0.0
    %922 = vmatpush1.msra.mxu0 0.0
    %923 = vmatprep.subr.mxu0 0.0
    %924 = vmatpush1.msra.mxu0 0.0
    %925 = vmatprep.subr.mxu0 0.0
    %926 = vmatpush1.msra.mxu0 0.0
    %927 = vmatprep.subr.mxu0 0.0
    %928 = vmatpush1.msra.mxu0 0.0
    %929 = vmatprep.subr.mxu0 0.0
    %930 = vmatpush1.msra.mxu0 0.0
    %931 = vmatprep.subr.mxu0 0.0
    %932 = vmatpush1.msra.mxu0 0.0
    %933 = vmatprep.subr.mxu0 0.0
    %934 = vmatpush1.msra.mxu0 0.0
    %935 = vmatprep.subr.mxu0 0.0
    %936 = vmatpush1.msra.mxu0 0.0
    %937 = vmatprep.subr.mxu0 0.0
    %938 = vmatpush1.msra.mxu0 0.0
    %939 = vmatprep.subr.mxu0 0.0
    %940 = vmatpush1.msra.mxu0 0.0
    %941 = vmatprep.subr.mxu0 0.0
    %942 = vmatpush1.msra.mxu0 0.0
    %943 = vmatprep.subr.mxu0 0.0
    %944 = vmatpush1.msra.mxu0 0.0
    %945 = vmatprep.subr.mxu0 0.0
    %946 = vmatpush1.msra.mxu0 0.0
    %947 = vmatprep.subr.mxu0 0.0
    %948 = vmatpush1.msra.mxu0 0.0
    %949 = vmatprep.subr.mxu0 0.0
    %950 = vmatpush1.msra.mxu0 0.0
    %951 = vmatprep.subr.mxu0 0.0
    %952 = vmatpush1.msra.mxu0 0.0
    %953 = vmatprep.subr.mxu0 0.0
    %954 = vmatpush1.msra.mxu0 0.0
    %955 = vmatprep.subr.mxu0 0.0
    %956 = vmatpush1.msra.mxu0 0.0
    %957 = vmatprep.subr.mxu0 0.0
    %958 = vmatpush1.msra.mxu0 0.0
    %959 = vmatprep.mubr.f32.mxu0 0.0
    %960 = vmatmul.mubr.f32.gmra.mrb[0].mxu0 %v893
    %v961 = vpop.f32.mrb[0].mxu0
    %v962 = vadd.f32 0.0, %v961
    %v963 = vpop.f32.mrb[0].mxu0
    %964 = vdwg.mxu0
    %966 = vrot.lane.b32.xlu0 %v210, 120
    %v967 = vpop.permute.xlu0 %966
    %v970 = vsel %vm387, %v887, 0
    %972 = vmatprep.subr.mxu0 0.0
    %973 = vmatpush1.msra.mxu0 %v967
    %974 = vmatprep.subr.mxu0 0.0
    %975 = vmatpush1.msra.mxu0 0.0
    %976 = vmatprep.subr.mxu0 0.0
    %977 = vmatpush1.msra.mxu0 0.0
    %978 = vmatprep.subr.mxu0 0.0
    %979 = vmatpush1.msra.mxu0 0.0
    %980 = vmatprep.subr.mxu0 0.0
    %981 = vmatpush1.msra.mxu0 0.0
    %982 = vmatprep.subr.mxu0 0.0
    %983 = vmatpush1.msra.mxu0 0.0
    %984 = vmatprep.subr.mxu0 0.0
    %985 = vmatpush1.msra.mxu0 0.0
    %986 = vmatprep.subr.mxu0 0.0
    %987 = vmatpush1.msra.mxu0 0.0
    %988 = vmatprep.subr.mxu0 0.0
    %989 = vmatpush1.msra.mxu0 0.0
    %990 = vmatprep.subr.mxu0 0.0
    %991 = vmatpush1.msra.mxu0 0.0
    %992 = vmatprep.subr.mxu0 0.0
    %993 = vmatpush1.msra.mxu0 0.0
    %994 = vmatprep.subr.mxu0 0.0
    %995 = vmatpush1.msra.mxu0 0.0
    %996 = vmatprep.subr.mxu0 0.0
    %997 = vmatpush1.msra.mxu0 0.0
    %998 = vmatprep.subr.mxu0 0.0
    %999 = vmatpush1.msra.mxu0 0.0
    %1000 = vmatprep.subr.mxu0 0.0
    %1001 = vmatpush1.msra.mxu0 0.0
    %1002 = vmatprep.subr.mxu0 0.0
    %1003 = vmatpush1.msra.mxu0 0.0
    %1004 = vmatprep.subr.mxu0 0.0
    %1005 = vmatpush1.msra.mxu0 0.0
    %1006 = vmatprep.subr.mxu0 0.0
    %1007 = vmatpush1.msra.mxu0 0.0
    %1008 = vmatprep.subr.mxu0 0.0
    %1009 = vmatpush1.msra.mxu0 0.0
    %1010 = vmatprep.subr.mxu0 0.0
    %1011 = vmatpush1.msra.mxu0 0.0
    %1012 = vmatprep.subr.mxu0 0.0
    %1013 = vmatpush1.msra.mxu0 0.0
    %1014 = vmatprep.subr.mxu0 0.0
    %1015 = vmatpush1.msra.mxu0 0.0
    %1016 = vmatprep.subr.mxu0 0.0
    %1017 = vmatpush1.msra.mxu0 0.0
    %1018 = vmatprep.subr.mxu0 0.0
    %1019 = vmatpush1.msra.mxu0 0.0
    %1020 = vmatprep.subr.mxu0 0.0
    %1021 = vmatpush1.msra.mxu0 0.0
    %1022 = vmatprep.subr.mxu0 0.0
    %1023 = vmatpush1.msra.mxu0 0.0
    %1024 = vmatprep.subr.mxu0 0.0
    %1025 = vmatpush1.msra.mxu0 0.0
    %1026 = vmatprep.subr.mxu0 0.0
    %1027 = vmatpush1.msra.mxu0 0.0
    %1028 = vmatprep.subr.mxu0 0.0
    %1029 = vmatpush1.msra.mxu0 0.0
    %1030 = vmatprep.subr.mxu0 0.0
    %1031 = vmatpush1.msra.mxu0 0.0
    %1032 = vmatprep.subr.mxu0 0.0
    %1033 = vmatpush1.msra.mxu0 0.0
    %1034 = vmatprep.subr.mxu0 0.0
    %1035 = vmatpush1.msra.mxu0 0.0
    %1036 = vmatprep.mubr.f32.mxu0 0.0
    %1037 = vmatmul.mubr.f32.gmra.mrb[0].mxu0 %v970
    %v1038 = vpop.f32.mrb[0].mxu0
    %v1039 = vadd.f32 0.0, %v1038
    %v1040 = vpop.f32.mrb[0].mxu0
    %1041 = vdwg.mxu0
    %1044 = vrot.lane.b32.xlu0 %v962, 8
    %v1045 = vpop.permute.xlu0 %1044
    %1046 = vrot.lane.b32.xlu0 %v1039, 8
    %v1047 = vpop.permute.xlu0 %1046
    %vm1050 = vcmask 130112
    %1051 = vst.msk [vmem:[#allocation2] sm:$0xff] %vm1050, %v1045
    %1052 = vst.msk [vmem:[#allocation2 + $0x8] sm:$0xff] %vm1050, %v1047
    %1053 = vrot.lane.b32.xlu0 %v379, 112
    %v1054 = vpop.permute.xlu0 %1053
    %1055 = vrot.lane.b32.xlu0 %v292, 112
    %v1056 = vpop.permute.xlu0 %1055
    %v1057 = vsel %vm387, %v1054, 0
    %v1059 = vsel %vm387, %v1056, 0
    %1061 = vmatprep.subr.mxu0 0.0
    %1062 = vmatpush1.xpose.msra.mxu0 %v1059
    %1063 = vmatprep.subr.mxu0 0.0
    %1064 = vmatpush1.xpose.msra.mxu0 0.0
    %1065 = vmatprep.subr.mxu0 0.0
    %1066 = vmatpush1.xpose.msra.mxu0 0.0
    %1067 = vmatprep.subr.mxu0 0.0
    %1068 = vmatpush1.xpose.msra.mxu0 0.0
    %1069 = vmatprep.subr.mxu0 0.0
    %1070 = vmatpush1.xpose.msra.mxu0 0.0
    %1071 = vmatprep.subr.mxu0 0.0
    %1072 = vmatpush1.xpose.msra.mxu0 0.0
    %1073 = vmatprep.subr.mxu0 0.0
    %1074 = vmatpush1.xpose.msra.mxu0 0.0
    %1075 = vmatprep.subr.mxu0 0.0
    %1076 = vmatpush1.xpose.msra.mxu0 0.0
    %1077 = vmatprep.subr.mxu0 0.0
    %1078 = vmatpush1.xpose.msra.mxu0 0.0
    %1079 = vmatprep.subr.mxu0 0.0
    %1080 = vmatpush1.xpose.msra.mxu0 0.0
    %1081 = vmatprep.subr.mxu0 0.0
    %1082 = vmatpush1.xpose.msra.mxu0 0.0
    %1083 = vmatprep.subr.mxu0 0.0
    %1084 = vmatpush1.xpose.msra.mxu0 0.0
    %1085 = vmatprep.subr.mxu0 0.0
    %1086 = vmatpush1.xpose.msra.mxu0 0.0
    %1087 = vmatprep.subr.mxu0 0.0
    %1088 = vmatpush1.xpose.msra.mxu0 0.0
    %1089 = vmatprep.subr.mxu0 0.0
    %1090 = vmatpush1.xpose.msra.mxu0 0.0
    %1091 = vmatprep.subr.mxu0 0.0
    %1092 = vmatpush1.xpose.msra.mxu0 0.0
    %1093 = vmatprep.subr.mxu0 0.0
    %1094 = vmatpush1.xpose.msra.mxu0 0.0
    %1095 = vmatprep.subr.mxu0 0.0
    %1096 = vmatpush1.xpose.msra.mxu0 0.0
    %1097 = vmatprep.subr.mxu0 0.0
    %1098 = vmatpush1.xpose.msra.mxu0 0.0
    %1099 = vmatprep.subr.mxu0 0.0
    %1100 = vmatpush1.xpose.msra.mxu0 0.0
    %1101 = vmatprep.subr.mxu0 0.0
    %1102 = vmatpush1.xpose.msra.mxu0 0.0
    %1103 = vmatprep.subr.mxu0 0.0
    %1104 = vmatpush1.xpose.msra.mxu0 0.0
    %1105 = vmatprep.subr.mxu0 0.0
    %1106 = vmatpush1.xpose.msra.mxu0 0.0
    %1107 = vmatprep.subr.mxu0 0.0
    %1108 = vmatpush1.xpose.msra.mxu0 0.0
    %1109 = vmatprep.subr.mxu0 0.0
    %1110 = vmatpush1.xpose.msra.mxu0 0.0
    %1111 = vmatprep.subr.mxu0 0.0
    %1112 = vmatpush1.xpose.msra.mxu0 0.0
    %1113 = vmatprep.subr.mxu0 0.0
    %1114 = vmatpush1.xpose.msra.mxu0 0.0
    %1115 = vmatprep.subr.mxu0 0.0
    %1116 = vmatpush1.xpose.msra.mxu0 0.0
    %1117 = vmatprep.subr.mxu0 0.0
    %1118 = vmatpush1.xpose.msra.mxu0 0.0
    %1119 = vmatprep.subr.mxu0 0.0
    %1120 = vmatpush1.xpose.msra.mxu0 0.0
    %1121 = vmatprep.subr.mxu0 0.0
    %1122 = vmatpush1.xpose.msra.mxu0 0.0
    %1123 = vmatprep.subr.mxu0 0.0
    %1124 = vmatpush1.xpose.msra.mxu0 0.0
    %1125 = vmatprep.mubr.f32.mxu0 0.0
    %1126 = vmatmul.mubr.f32.gmra.mrb[0].mxu0 %v1057
    %v1127 = vpop.f32.mrb[0].mxu0
    %v1128 = vadd.f32 0.0, %v1127
    %v1129 = vpop.f32.mrb[0].mxu0
    %1130 = vdwg.mxu0
    %1131 = vrot.lane.b32.xlu0 %v384, 112
    %v1132 = vpop.permute.xlu0 %1131
    %1133 = vrot.lane.b32.xlu0 %v297, 112
    %v1134 = vpop.permute.xlu0 %1133
    %v1135 = vsel %vm387, %v1132, 0
    %v1137 = vsel %vm387, %v1134, 0
    %1139 = vmatprep.subr.mxu0 0.0
    %1140 = vmatpush1.xpose.msra.mxu0 %v1137
    %1141 = vmatprep.subr.mxu0 0.0
    %1142 = vmatpush1.xpose.msra.mxu0 0.0
    %1143 = vmatprep.subr.mxu0 0.0
    %1144 = vmatpush1.xpose.msra.mxu0 0.0
    %1145 = vmatprep.subr.mxu0 0.0
    %1146 = vmatpush1.xpose.msra.mxu0 0.0
    %1147 = vmatprep.subr.mxu0 0.0
    %1148 = vmatpush1.xpose.msra.mxu0 0.0
    %1149 = vmatprep.subr.mxu0 0.0
    %1150 = vmatpush1.xpose.msra.mxu0 0.0
    %1151 = vmatprep.subr.mxu0 0.0
    %1152 = vmatpush1.xpose.msra.mxu0 0.0
    %1153 = vmatprep.subr.mxu0 0.0
    %1154 = vmatpush1.xpose.msra.mxu0 0.0
    %1155 = vmatprep.subr.mxu0 0.0
    %1156 = vmatpush1.xpose.msra.mxu0 0.0
    %1157 = vmatprep.subr.mxu0 0.0
    %1158 = vmatpush1.xpose.msra.mxu0 0.0
    %1159 = vmatprep.subr.mxu0 0.0
    %1160 = vmatpush1.xpose.msra.mxu0 0.0
    %1161 = vmatprep.subr.mxu0 0.0
    %1162 = vmatpush1.xpose.msra.mxu0 0.0
    %1163 = vmatprep.subr.mxu0 0.0
    %1164 = vmatpush1.xpose.msra.mxu0 0.0
    %1165 = vmatprep.subr.mxu0 0.0
    %1166 = vmatpush1.xpose.msra.mxu0 0.0
    %1167 = vmatprep.subr.mxu0 0.0
    %1168 = vmatpush1.xpose.msra.mxu0 0.0
    %1169 = vmatprep.subr.mxu0 0.0
    %1170 = vmatpush1.xpose.msra.mxu0 0.0
    %1171 = vmatprep.subr.mxu0 0.0
    %1172 = vmatpush1.xpose.msra.mxu0 0.0
    %1173 = vmatprep.subr.mxu0 0.0
    %1174 = vmatpush1.xpose.msra.mxu0 0.0
    %1175 = vmatprep.subr.mxu0 0.0
    %1176 = vmatpush1.xpose.msra.mxu0 0.0
    %1177 = vmatprep.subr.mxu0 0.0
    %1178 = vmatpush1.xpose.msra.mxu0 0.0
    %1179 = vmatprep.subr.mxu0 0.0
    %1180 = vmatpush1.xpose.msra.mxu0 0.0
    %1181 = vmatprep.subr.mxu0 0.0
    %1182 = vmatpush1.xpose.msra.mxu0 0.0
    %1183 = vmatprep.subr.mxu0 0.0
    %1184 = vmatpush1.xpose.msra.mxu0 0.0
    %1185 = vmatprep.subr.mxu0 0.0
    %1186 = vmatpush1.xpose.msra.mxu0 0.0
    %1187 = vmatprep.subr.mxu0 0.0
    %1188 = vmatpush1.xpose.msra.mxu0 0.0
    %1189 = vmatprep.subr.mxu0 0.0
    %1190 = vmatpush1.xpose.msra.mxu0 0.0
    %1191 = vmatprep.subr.mxu0 0.0
    %1192 = vmatpush1.xpose.msra.mxu0 0.0
    %1193 = vmatprep.subr.mxu0 0.0
    %1194 = vmatpush1.xpose.msra.mxu0 0.0
    %1195 = vmatprep.subr.mxu0 0.0
    %1196 = vmatpush1.xpose.msra.mxu0 0.0
    %1197 = vmatprep.subr.mxu0 0.0
    %1198 = vmatpush1.xpose.msra.mxu0 0.0
    %1199 = vmatprep.subr.mxu0 0.0
    %1200 = vmatpush1.xpose.msra.mxu0 0.0
    %1201 = vmatprep.subr.mxu0 0.0
    %1202 = vmatpush1.xpose.msra.mxu0 0.0
    %1203 = vmatprep.mubr.f32.mxu0 0.0
    %1204 = vmatmul.mubr.f32.gmra.mrb[0].mxu0 %v1135
    %v1205 = vpop.f32.mrb[0].mxu0
    %v1206 = vadd.f32 0.0, %v1205
    %v1207 = vpop.f32.mrb[0].mxu0
    %1208 = vdwg.mxu0
    %v1209 = vsel %vm387, %v1128, -inf
    %1210 = vmax.xlane.f32.xlu0 %v1209
    %v1211 = vpop.xlane.xlu0 %1210
    %v1212 = vsel %vm387, %v1206, -inf
    %1213 = vmax.xlane.f32.xlu0 %v1212
    %v1214 = vpop.xlane.xlu0 %1213
    %v1215 = vsub.f32 %v1128, %v1211
    %v1216 = vsub.f32 %v1206, %v1214
    %v1217 = vmul.f32 %v1215, 1.442695
    %v1218 = vpow.pop %v1217
    %v1219 = vmul.f32 %v1216, 1.442695
    %v1220 = vpow.pop %v1219
    %v1221 = vsel %vm387, %v1218, 0.0
    %1222 = vadd.xlane.f32.xlu0 %v1221
    %v1223 = vpop.xlane.xlu0 %1222
    %v1224 = vsel %vm387, %v1220, 0.0
    %1225 = vadd.xlane.f32.xlu0 %v1224
    %v1226 = vpop.xlane.xlu0 %1225
    %v1227 = vrcp.pop %v1223
    %v1228 = vrcp.pop %v1226
    %v1229 = vmul.f32 %v1218, %v1227
    %v1230 = vmul.f32 %v1220, %v1228
    %1231 = vrot.lane.b32.xlu0 %v205, 112
    %v1232 = vpop.permute.xlu0 %1231
    %v1235 = vsel %vm387, %v1229, 0
    %1237 = vmatprep.subr.mxu0 0.0
    %1238 = vmatpush1.msra.mxu0 %v1232
    %1239 = vmatprep.subr.mxu0 0.0
    %1240 = vmatpush1.msra.mxu0 0.0
    %1241 = vmatprep.subr.mxu0 0.0
    %1242 = vmatpush1.msra.mxu0 0.0
    %1243 = vmatprep.subr.mxu0 0.0
    %1244 = vmatpush1.msra.mxu0 0.0
    %1245 = vmatprep.subr.mxu0 0.0
    %1246 = vmatpush1.msra.mxu0 0.0
    %1247 = vmatprep.subr.mxu0 0.0
    %1248 = vmatpush1.msra.mxu0 0.0
    %1249 = vmatprep.subr.mxu0 0.0
    %1250 = vmatpush1.msra.mxu0 0.0
    %1251 = vmatprep.subr.mxu0 0.0
    %1252 = vmatpush1.msra.mxu0 0.0
    %1253 = vmatprep.subr.mxu0 0.0
    %1254 = vmatpush1.msra.mxu0 0.0
    %1255 = vmatprep.subr.mxu0 0.0
    %1256 = vmatpush1.msra.mxu0 0.0
    %1257 = vmatprep.subr.mxu0 0.0
    %1258 = vmatpush1.msra.mxu0 0.0
    %1259 = vmatprep.subr.mxu0 0.0
    %1260 = vmatpush1.msra.mxu0 0.0
    %1261 = vmatprep.subr.mxu0 0.0
    %1262 = vmatpush1.msra.mxu0 0.0
    %1263 = vmatprep.subr.mxu0 0.0
    %1264 = vmatpush1.msra.mxu0 0.0
    %1265 = vmatprep.subr.mxu0 0.0
    %1266 = vmatpush1.msra.mxu0 0.0
    %1267 = vmatprep.subr.mxu0 0.0
    %1268 = vmatpush1.msra.mxu0 0.0
    %1269 = vmatprep.subr.mxu0 0.0
    %1270 = vmatpush1.msra.mxu0 0.0
    %1271 = vmatprep.subr.mxu0 0.0
    %1272 = vmatpush1.msra.mxu0 0.0
    %1273 = vmatprep.subr.mxu0 0.0
    %1274 = vmatpush1.msra.mxu0 0.0
    %1275 = vmatprep.subr.mxu0 0.0
    %1276 = vmatpush1.msra.mxu0 0.0
    %1277 = vmatprep.subr.mxu0 0.0
    %1278 = vmatpush1.msra.mxu0 0.0
    %1279 = vmatprep.subr.mxu0 0.0
    %1280 = vmatpush1.msra.mxu0 0.0
    %1281 = vmatprep.subr.mxu0 0.0
    %1282 = vmatpush1.msra.mxu0 0.0
    %1283 = vmatprep.subr.mxu0 0.0
    %1284 = vmatpush1.msra.mxu0 0.0
    %1285 = vmatprep.subr.mxu0 0.0
    %1286 = vmatpush1.msra.mxu0 0.0
    %1287 = vmatprep.subr.mxu0 0.0
    %1288 = vmatpush1.msra.mxu0 0.0
    %1289 = vmatprep.subr.mxu0 0.0
    %1290 = vmatpush1.msra.mxu0 0.0
    %1291 = vmatprep.subr.mxu0 0.0
    %1292 = vmatpush1.msra.mxu0 0.0
    %1293 = vmatprep.subr.mxu0 0.0
    %1294 = vmatpush1.msra.mxu0 0.0
    %1295 = vmatprep.subr.mxu0 0.0
    %1296 = vmatpush1.msra.mxu0 0.0
    %1297 = vmatprep.subr.mxu0 0.0
    %1298 = vmatpush1.msra.mxu0 0.0
    %1299 = vmatprep.subr.mxu0 0.0
    %1300 = vmatpush1.msra.mxu0 0.0
    %1301 = vmatprep.mubr.f32.mxu0 0.0
    %1302 = vmatmul.mubr.f32.gmra.mrb[0].mxu0 %v1235
    %v1303 = vpop.f32.mrb[0].mxu0
    %v1304 = vadd.f32 0.0, %v1303
    %v1305 = vpop.f32.mrb[0].mxu0
    %1306 = vdwg.mxu0
    %1307 = vrot.lane.b32.xlu0 %v210, 112
    %v1308 = vpop.permute.xlu0 %1307
    %v1311 = vsel %vm387, %v1230, 0
    %1313 = vmatprep.subr.mxu0 0.0
    %1314 = vmatpush1.msra.mxu0 %v1308
    %1315 = vmatprep.subr.mxu0 0.0
    %1316 = vmatpush1.msra.mxu0 0.0
    %1317 = vmatprep.subr.mxu0 0.0
    %1318 = vmatpush1.msra.mxu0 0.0
    %1319 = vmatprep.subr.mxu0 0.0
    %1320 = vmatpush1.msra.mxu0 0.0
    %1321 = vmatprep.subr.mxu0 0.0
    %1322 = vmatpush1.msra.mxu0 0.0
    %1323 = vmatprep.subr.mxu0 0.0
    %1324 = vmatpush1.msra.mxu0 0.0
    %1325 = vmatprep.subr.mxu0 0.0
    %1326 = vmatpush1.msra.mxu0 0.0
    %1327 = vmatprep.subr.mxu0 0.0
    %1328 = vmatpush1.msra.mxu0 0.0
    %1329 = vmatprep.subr.mxu0 0.0
    %1330 = vmatpush1.msra.mxu0 0.0
    %1331 = vmatprep.subr.mxu0 0.0
    %1332 = vmatpush1.msra.mxu0 0.0
    %1333 = vmatprep.subr.mxu0 0.0
    %1334 = vmatpush1.msra.mxu0 0.0
    %1335 = vmatprep.subr.mxu0 0.0
    %1336 = vmatpush1.msra.mxu0 0.0
    %1337 = vmatprep.subr.mxu0 0.0
    %1338 = vmatpush1.msra.mxu0 0.0
    %1339 = vmatprep.subr.mxu0 0.0
    %1340 = vmatpush1.msra.mxu0 0.0
    %1341 = vmatprep.subr.mxu0 0.0
    %1342 = vmatpush1.msra.mxu0 0.0
    %1343 = vmatprep.subr.mxu0 0.0
    %1344 = vmatpush1.msra.mxu0 0.0
    %1345 = vmatprep.subr.mxu0 0.0
    %1346 = vmatpush1.msra.mxu0 0.0
    %1347 = vmatprep.subr.mxu0 0.0
    %1348 = vmatpush1.msra.mxu0 0.0
    %1349 = vmatprep.subr.mxu0 0.0
    %1350 = vmatpush1.msra.mxu0 0.0
    %1351 = vmatprep.subr.mxu0 0.0
    %1352 = vmatpush1.msra.mxu0 0.0
    %1353 = vmatprep.subr.mxu0 0.0
    %1354 = vmatpush1.msra.mxu0 0.0
    %1355 = vmatprep.subr.mxu0 0.0
    %1356 = vmatpush1.msra.mxu0 0.0
    %1357 = vmatprep.subr.mxu0 0.0
    %1358 = vmatpush1.msra.mxu0 0.0
    %1359 = vmatprep.subr.mxu0 0.0
    %1360 = vmatpush1.msra.mxu0 0.0
    %1361 = vmatprep.subr.mxu0 0.0
    %1362 = vmatpush1.msra.mxu0 0.0
    %1363 = vmatprep.subr.mxu0 0.0
    %1364 = vmatpush1.msra.mxu0 0.0
    %1365 = vmatprep.subr.mxu0 0.0
    %1366 = vmatpush1.msra.mxu0 0.0
    %1367 = vmatprep.subr.mxu0 0.0
    %1368 = vmatpush1.msra.mxu0 0.0
    %1369 = vmatprep.subr.mxu0 0.0
    %1370 = vmatpush1.msra.mxu0 0.0
    %1371 = vmatprep.subr.mxu0 0.0
    %1372 = vmatpush1.msra.mxu0 0.0
    %1373 = vmatprep.subr.mxu0 0.0
    %1374 = vmatpush1.msra.mxu0 0.0
    %1375 = vmatprep.subr.mxu0 0.0
    %1376 = vmatpush1.msra.mxu0 0.0
    %1377 = vmatprep.mubr.f32.mxu0 0.0
    %1378 = vmatmul.mubr.f32.gmra.mrb[0].mxu0 %v1311
    %v1379 = vpop.f32.mrb[0].mxu0
    %v1380 = vadd.f32 0.0, %v1379
    %v1381 = vpop.f32.mrb[0].mxu0
    %1382 = vdwg.mxu0
    %1385 = vrot.lane.b32.xlu0 %v1304, 16
    %v1386 = vpop.permute.xlu0 %1385
    %1387 = vrot.lane.b32.xlu0 %v1380, 16
    %v1388 = vpop.permute.xlu0 %1387
    %vm1391 = vcmask 195712
    %1392 = vst.msk [vmem:[#allocation2] sm:$0xff] %vm1391, %v1386
    %1393 = vst.msk [vmem:[#allocation2 + $0x8] sm:$0xff] %vm1391, %v1388
    %1394 = vrot.lane.b32.xlu0 %v379, 104
    %v1395 = vpop.permute.xlu0 %1394
    %1396 = vrot.lane.b32.xlu0 %v292, 104
    %v1397 = vpop.permute.xlu0 %1396
    %v1398 = vsel %vm387, %v1395, 0
    %v1400 = vsel %vm387, %v1397, 0
    %1402 = vmatprep.subr.mxu0 0.0
    %1403 = vmatpush1.xpose.msra.mxu0 %v1400
    %1404 = vmatprep.subr.mxu0 0.0
    %1405 = vmatpush1.xpose.msra.mxu0 0.0
    %1406 = vmatprep.subr.mxu0 0.0
    %1407 = vmatpush1.xpose.msra.mxu0 0.0
    %1408 = vmatprep.subr.mxu0 0.0
    %1409 = vmatpush1.xpose.msra.mxu0 0.0
    %1410 = vmatprep.subr.mxu0 0.0
    %1411 = vmatpush1.xpose.msra.mxu0 0.0
    %1412 = vmatprep.subr.mxu0 0.0
    %1413 = vmatpush1.xpose.msra.mxu0 0.0
    %1414 = vmatprep.subr.mxu0 0.0
    %1415 = vmatpush1.xpose.msra.mxu0 0.0
    %1416 = vmatprep.subr.mxu0 0.0
    %1417 = vmatpush1.xpose.msra.mxu0 0.0
    %1418 = vmatprep.subr.mxu0 0.0
    %1419 = vmatpush1.xpose.msra.mxu0 0.0
    %1420 = vmatprep.subr.mxu0 0.0
    %1421 = vmatpush1.xpose.msra.mxu0 0.0
    %1422 = vmatprep.subr.mxu0 0.0
    %1423 = vmatpush1.xpose.msra.mxu0 0.0
    %1424 = vmatprep.subr.mxu0 0.0
    %1425 = vmatpush1.xpose.msra.mxu0 0.0
    %1426 = vmatprep.subr.mxu0 0.0
    %1427 = vmatpush1.xpose.msra.mxu0 0.0
    %1428 = vmatprep.subr.mxu0 0.0
    %1429 = vmatpush1.xpose.msra.mxu0 0.0
    %1430 = vmatprep.subr.mxu0 0.0
    %1431 = vmatpush1.xpose.msra.mxu0 0.0
    %1432 = vmatprep.subr.mxu0 0.0
    %1433 = vmatpush1.xpose.msra.mxu0 0.0
    %1434 = vmatprep.subr.mxu0 0.0
    %1435 = vmatpush1.xpose.msra.mxu0 0.0
    %1436 = vmatprep.subr.mxu0 0.0
    %1437 = vmatpush1.xpose.msra.mxu0 0.0
    %1438 = vmatprep.subr.mxu0 0.0
    %1439 = vmatpush1.xpose.msra.mxu0 0.0
    %1440 = vmatprep.subr.mxu0 0.0
    %1441 = vmatpush1.xpose.msra.mxu0 0.0
    %1442 = vmatprep.subr.mxu0 0.0
    %1443 = vmatpush1.xpose.msra.mxu0 0.0
    %1444 = vmatprep.subr.mxu0 0.0
    %1445 = vmatpush1.xpose.msra.mxu0 0.0
    %1446 = vmatprep.subr.mxu0 0.0
    %1447 = vmatpush1.xpose.msra.mxu0 0.0
    %1448 = vmatprep.subr.mxu0 0.0
    %1449 = vmatpush1.xpose.msra.mxu0 0.0
    %1450 = vmatprep.subr.mxu0 0.0
    %1451 = vmatpush1.xpose.msra.mxu0 0.0
    %1452 = vmatprep.subr.mxu0 0.0
    %1453 = vmatpush1.xpose.msra.mxu0 0.0
    %1454 = vmatprep.subr.mxu0 0.0
    %1455 = vmatpush1.xpose.msra.mxu0 0.0
    %1456 = vmatprep.subr.mxu0 0.0
    %1457 = vmatpush1.xpose.msra.mxu0 0.0
    %1458 = vmatprep.subr.mxu0 0.0
    %1459 = vmatpush1.xpose.msra.mxu0 0.0
    %1460 = vmatprep.subr.mxu0 0.0
    %1461 = vmatpush1.xpose.msra.mxu0 0.0
    %1462 = vmatprep.subr.mxu0 0.0
    %1463 = vmatpush1.xpose.msra.mxu0 0.0
    %1464 = vmatprep.subr.mxu0 0.0
    %1465 = vmatpush1.xpose.msra.mxu0 0.0
    %1466 = vmatprep.mubr.f32.mxu0 0.0
    %1467 = vmatmul.mubr.f32.gmra.mrb[0].mxu0 %v1398
    %v1468 = vpop.f32.mrb[0].mxu0
    %v1469 = vadd.f32 0.0, %v1468
    %v1470 = vpop.f32.mrb[0].mxu0
    %1471 = vdwg.mxu0
    %1472 = vrot.lane.b32.xlu0 %v384, 104
    %v1473 = vpop.permute.xlu0 %1472
    %1474 = vrot.lane.b32.xlu0 %v297, 104
    %v1475 = vpop.permute.xlu0 %1474
    %v1476 = vsel %vm387, %v1473, 0
    %v1478 = vsel %vm387, %v1475, 0
    %1480 = vmatprep.subr.mxu0 0.0
    %1481 = vmatpush1.xpose.msra.mxu0 %v1478
    %1482 = vmatprep.subr.mxu0 0.0
    %1483 = vmatpush1.xpose.msra.mxu0 0.0
    %1484 = vmatprep.subr.mxu0 0.0
    %1485 = vmatpush1.xpose.msra.mxu0 0.0
    %1486 = vmatprep.subr.mxu0 0.0
    %1487 = vmatpush1.xpose.msra.mxu0 0.0
    %1488 = vmatprep.subr.mxu0 0.0
    %1489 = vmatpush1.xpose.msra.mxu0 0.0
    %1490 = vmatprep.subr.mxu0 0.0
    %1491 = vmatpush1.xpose.msra.mxu0 0.0
    %1492 = vmatprep.subr.mxu0 0.0
    %1493 = vmatpush1.xpose.msra.mxu0 0.0
    %1494 = vmatprep.subr.mxu0 0.0
    %1495 = vmatpush1.xpose.msra.mxu0 0.0
    %1496 = vmatprep.subr.mxu0 0.0
    %1497 = vmatpush1.xpose.msra.mxu0 0.0
    %1498 = vmatprep.subr.mxu0 0.0
    %1499 = vmatpush1.xpose.msra.mxu0 0.0
    %1500 = vmatprep.subr.mxu0 0.0
    %1501 = vmatpush1.xpose.msra.mxu0 0.0
    %1502 = vmatprep.subr.mxu0 0.0
    %1503 = vmatpush1.xpose.msra.mxu0 0.0
    %1504 = vmatprep.subr.mxu0 0.0
    %1505 = vmatpush1.xpose.msra.mxu0 0.0
    %1506 = vmatprep.subr.mxu0 0.0
    %1507 = vmatpush1.xpose.msra.mxu0 0.0
    %1508 = vmatprep.subr.mxu0 0.0
    %1509 = vmatpush1.xpose.msra.mxu0 0.0
    %1510 = vmatprep.subr.mxu0 0.0
    %1511 = vmatpush1.xpose.msra.mxu0 0.0
    %1512 = vmatprep.subr.mxu0 0.0
    %1513 = vmatpush1.xpose.msra.mxu0 0.0
    %1514 = vmatprep.subr.mxu0 0.0
    %1515 = vmatpush1.xpose.msra.mxu0 0.0
    %1516 = vmatprep.subr.mxu0 0.0
    %1517 = vmatpush1.xpose.msra.mxu0 0.0
    %1518 = vmatprep.subr.mxu0 0.0
    %1519 = vmatpush1.xpose.msra.mxu0 0.0
    %1520 = vmatprep.subr.mxu0 0.0
    %1521 = vmatpush1.xpose.msra.mxu0 0.0
    %1522 = vmatprep.subr.mxu0 0.0
    %1523 = vmatpush1.xpose.msra.mxu0 0.0
    %1524 = vmatprep.subr.mxu0 0.0
    %1525 = vmatpush1.xpose.msra.mxu0 0.0
    %1526 = vmatprep.subr.mxu0 0.0
    %1527 = vmatpush1.xpose.msra.mxu0 0.0
    %1528 = vmatprep.subr.mxu0 0.0
    %1529 = vmatpush1.xpose.msra.mxu0 0.0
    %1530 = vmatprep.subr.mxu0 0.0
    %1531 = vmatpush1.xpose.msra.mxu0 0.0
    %1532 = vmatprep.subr.mxu0 0.0
    %1533 = vmatpush1.xpose.msra.mxu0 0.0
    %1534 = vmatprep.subr.mxu0 0.0
    %1535 = vmatpush1.xpose.msra.mxu0 0.0
    %1536 = vmatprep.subr.mxu0 0.0
    %1537 = vmatpush1.xpose.msra.mxu0 0.0
    %1538 = vmatprep.subr.mxu0 0.0
    %1539 = vmatpush1.xpose.msra.mxu0 0.0
    %1540 = vmatprep.subr.mxu0 0.0
    %1541 = vmatpush1.xpose.msra.mxu0 0.0
    %1542 = vmatprep.subr.mxu0 0.0
    %1543 = vmatpush1.xpose.msra.mxu0 0.0
    %1544 = vmatprep.mubr.f32.mxu0 0.0
    %1545 = vmatmul.mubr.f32.gmra.mrb[0].mxu0 %v1476
    %v1546 = vpop.f32.mrb[0].mxu0
    %v1547 = vadd.f32 0.0, %v1546
    %v1548 = vpop.f32.mrb[0].mxu0
    %1549 = vdwg.mxu0
    %v1550 = vsel %vm387, %v1469, -inf
    %1551 = vmax.xlane.f32.xlu0 %v1550
    %v1552 = vpop.xlane.xlu0 %1551
    %v1553 = vsel %vm387, %v1547, -inf
    %1554 = vmax.xlane.f32.xlu0 %v1553
    %v1555 = vpop.xlane.xlu0 %1554
    %v1556 = vsub.f32 %v1469, %v1552
    %v1557 = vsub.f32 %v1547, %v1555
    %v1558 = vmul.f32 %v1556, 1.442695
    %v1559 = vpow.pop %v1558
    %v1560 = vmul.f32 %v1557, 1.442695
    %v1561 = vpow.pop %v1560
    %v1562 = vsel %vm387, %v1559, 0.0
    %1563 = vadd.xlane.f32.xlu0 %v1562
    %v1564 = vpop.xlane.xlu0 %1563
    %v1565 = vsel %vm387, %v1561, 0.0
    %1566 = vadd.xlane.f32.xlu0 %v1565
    %v1567 = vpop.xlane.xlu0 %1566
    %v1568 = vrcp.pop %v1564
    %v1569 = vrcp.pop %v1567
    %v1570 = vmul.f32 %v1559, %v1568
    %v1571 = vmul.f32 %v1561, %v1569
    %1572 = vrot.lane.b32.xlu0 %v205, 104
    %v1573 = vpop.permute.xlu0 %1572
    %v1576 = vsel %vm387, %v1570, 0
    %1578 = vmatprep.subr.mxu0 0.0
    %1579 = vmatpush1.msra.mxu0 %v1573
    %1580 = vmatprep.subr.mxu0 0.0
    %1581 = vmatpush1.msra.mxu0 0.0
    %1582 = vmatprep.subr.mxu0 0.0
    %1583 = vmatpush1.msra.mxu0 0.0
    %1584 = vmatprep.subr.mxu0 0.0
    %1585 = vmatpush1.msra.mxu0 0.0
    %1586 = vmatprep.subr.mxu0 0.0
    %1587 = vmatpush1.msra.mxu0 0.0
    %1588 = vmatprep.subr.mxu0 0.0
    %1589 = vmatpush1.msra.mxu0 0.0
    %1590 = vmatprep.subr.mxu0 0.0
    %1591 = vmatpush1.msra.mxu0 0.0
    %1592 = vmatprep.subr.mxu0 0.0
    %1593 = vmatpush1.msra.mxu0 0.0
    %1594 = vmatprep.subr.mxu0 0.0
    %1595 = vmatpush1.msra.mxu0 0.0
    %1596 = vmatprep.subr.mxu0 0.0
    %1597 = vmatpush1.msra.mxu0 0.0
    %1598 = vmatprep.subr.mxu0 0.0
    %1599 = vmatpush1.msra.mxu0 0.0
    %1600 = vmatprep.subr.mxu0 0.0
    %1601 = vmatpush1.msra.mxu0 0.0
    %1602 = vmatprep.subr.mxu0 0.0
    %1603 = vmatpush1.msra.mxu0 0.0
    %1604 = vmatprep.subr.mxu0 0.0
    %1605 = vmatpush1.msra.mxu0 0.0
    %1606 = vmatprep.subr.mxu0 0.0
    %1607 = vmatpush1.msra.mxu0 0.0
    %1608 = vmatprep.subr.mxu0 0.0
    %1609 = vmatpush1.msra.mxu0 0.0
    %1610 = vmatprep.subr.mxu0 0.0
    %1611 = vmatpush1.msra.mxu0 0.0
    %1612 = vmatprep.subr.mxu0 0.0
    %1613 = vmatpush1.msra.mxu0 0.0
    %1614 = vmatprep.subr.mxu0 0.0
    %1615 = vmatpush1.msra.mxu0 0.0
    %1616 = vmatprep.subr.mxu0 0.0
    %1617 = vmatpush1.msra.mxu0 0.0
    %1618 = vmatprep.subr.mxu0 0.0
    %1619 = vmatpush1.msra.mxu0 0.0
    %1620 = vmatprep.subr.mxu0 0.0
    %1621 = vmatpush1.msra.mxu0 0.0
    %1622 = vmatprep.subr.mxu0 0.0
    %1623 = vmatpush1.msra.mxu0 0.0
    %1624 = vmatprep.subr.mxu0 0.0
    %1625 = vmatpush1.msra.mxu0 0.0
    %1626 = vmatprep.subr.mxu0 0.0
    %1627 = vmatpush1.msra.mxu0 0.0
    %1628 = vmatprep.subr.mxu0 0.0
    %1629 = vmatpush1.msra.mxu0 0.0
    %1630 = vmatprep.subr.mxu0 0.0
    %1631 = vmatpush1.msra.mxu0 0.0
    %1632 = vmatprep.subr.mxu0 0.0
    %1633 = vmatpush1.msra.mxu0 0.0
    %1634 = vmatprep.subr.mxu0 0.0
    %1635 = vmatpush1.msra.mxu0 0.0
    %1636 = vmatprep.subr.mxu0 0.0
    %1637 = vmatpush1.msra.mxu0 0.0
    %1638 = vmatprep.subr.mxu0 0.0
    %1639 = vmatpush1.msra.mxu0 0.0
    %1640 = vmatprep.subr.mxu0 0.0
    %1641 = vmatpush1.msra.mxu0 0.0
    %1642 = vmatprep.mubr.f32.mxu0 0.0
    %1643 = vmatmul.mubr.f32.gmra.mrb[0].mxu0 %v1576
    %v1644 = vpop.f32.mrb[0].mxu0
    %v1645 = vadd.f32 0.0, %v1644
    %v1646 = vpop.f32.mrb[0].mxu0
    %1647 = vdwg.mxu0
    %1648 = vrot.lane.b32.xlu0 %v210, 104
    %v1649 = vpop.permute.xlu0 %1648
    %v1652 = vsel %vm387, %v1571, 0
    %1654 = vmatprep.subr.mxu0 0.0
    %1655 = vmatpush1.msra.mxu0 %v1649
    %1656 = vmatprep.subr.mxu0 0.0
    %1657 = vmatpush1.msra.mxu0 0.0
    %1658 = vmatprep.subr.mxu0 0.0
    %1659 = vmatpush1.msra.mxu0 0.0
    %1660 = vmatprep.subr.mxu0 0.0
    %1661 = vmatpush1.msra.mxu0 0.0
    %1662 = vmatprep.subr.mxu0 0.0
    %1663 = vmatpush1.msra.mxu0 0.0
    %1664 = vmatprep.subr.mxu0 0.0
    %1665 = vmatpush1.msra.mxu0 0.0
    %1666 = vmatprep.subr.mxu0 0.0
    %1667 = vmatpush1.msra.mxu0 0.0
    %1668 = vmatprep.subr.mxu0 0.0
    %1669 = vmatpush1.msra.mxu0 0.0
    %1670 = vmatprep.subr.mxu0 0.0
    %1671 = vmatpush1.msra.mxu0 0.0
    %1672 = vmatprep.subr.mxu0 0.0
    %1673 = vmatpush1.msra.mxu0 0.0
    %1674 = vmatprep.subr.mxu0 0.0
    %1675 = vmatpush1.msra.mxu0 0.0
    %1676 = vmatprep.subr.mxu0 0.0
    %1677 = vmatpush1.msra.mxu0 0.0
    %1678 = vmatprep.subr.mxu0 0.0
    %1679 = vmatpush1.msra.mxu0 0.0
    %1680 = vmatprep.subr.mxu0 0.0
    %1681 = vmatpush1.msra.mxu0 0.0
    %1682 = vmatprep.subr.mxu0 0.0
    %1683 = vmatpush1.msra.mxu0 0.0
    %1684 = vmatprep.subr.mxu0 0.0
    %1685 = vmatpush1.msra.mxu0 0.0
    %1686 = vmatprep.subr.mxu0 0.0
    %1687 = vmatpush1.msra.mxu0 0.0
    %1688 = vmatprep.subr.mxu0 0.0
    %1689 = vmatpush1.msra.mxu0 0.0
    %1690 = vmatprep.subr.mxu0 0.0
    %1691 = vmatpush1.msra.mxu0 0.0
    %1692 = vmatprep.subr.mxu0 0.0
    %1693 = vmatpush1.msra.mxu0 0.0
    %1694 = vmatprep.subr.mxu0 0.0
    %1695 = vmatpush1.msra.mxu0 0.0
    %1696 = vmatprep.subr.mxu0 0.0
    %1697 = vmatpush1.msra.mxu0 0.0
    %1698 = vmatprep.subr.mxu0 0.0
    %1699 = vmatpush1.msra.mxu0 0.0
    %1700 = vmatprep.subr.mxu0 0.0
    %1701 = vmatpush1.msra.mxu0 0.0
    %1702 = vmatprep.subr.mxu0 0.0
    %1703 = vmatpush1.msra.mxu0 0.0
    %1704 = vmatprep.subr.mxu0 0.0
    %1705 = vmatpush1.msra.mxu0 0.0
    %1706 = vmatprep.subr.mxu0 0.0
    %1707 = vmatpush1.msra.mxu0 0.0
    %1708 = vmatprep.subr.mxu0 0.0
    %1709 = vmatpush1.msra.mxu0 0.0
    %1710 = vmatprep.subr.mxu0 0.0
    %1711 = vmatpush1.msra.mxu0 0.0
    %1712 = vmatprep.subr.mxu0 0.0
    %1713 = vmatpush1.msra.mxu0 0.0
    %1714 = vmatprep.subr.mxu0 0.0
    %1715 = vmatpush1.msra.mxu0 0.0
    %1716 = vmatprep.subr.mxu0 0.0
    %1717 = vmatpush1.msra.mxu0 0.0
    %1718 = vmatprep.mubr.f32.mxu0 0.0
    %1719 = vmatmul.mubr.f32.gmra.mrb[0].mxu0 %v1652
    %v1720 = vpop.f32.mrb[0].mxu0
    %v1721 = vadd.f32 0.0, %v1720
    %v1722 = vpop.f32.mrb[0].mxu0
    %1723 = vdwg.mxu0
    %1726 = vrot.lane.b32.xlu0 %v1645, 24
    %v1727 = vpop.permute.xlu0 %1726
    %1728 = vrot.lane.b32.xlu0 %v1721, 24
    %v1729 = vpop.permute.xlu0 %1728
    %vm1732 = vcmask 261312
    %1733 = vst.msk [vmem:[#allocation2] sm:$0xff] %vm1732, %v1727
    %1734 = vst.msk [vmem:[#allocation2 + $0x8] sm:$0xff] %vm1732, %v1729
    %v1735 = vld [vmem:[#allocation2] sm:$0xff]
    %v1736 = vld [vmem:[#allocation2 + $0x8] sm:$0xff]
    %v1737 = vld [vmem:[#allocation14] sm:$0xff]
    %v1738 = vld [vmem:[#allocation14 + $0x8] sm:$0xff]
    %v1739 = vld [vmem:[#allocation14 + $0x10] sm:$0xff]
    %v1740 = vld [vmem:[#allocation14 + $0x18] sm:$0xff]
    %v1741 = vld [vmem:[%s7] sm:$0x1]
    %v1743 = vlaneseq
    %v1744 = vshrl.u32 %v1743, 7
    %v1745 = vsub.s32 0, %v1744
    %v1746 = vrot.slane %v1741, %v1745
    %v1749 = vsel %vm131, %v1735, 0
    %v1752 = vsel %vm131, %v1736, 0
    %1754 = vmatprep.subr.mxu0 0.0
    %1755 = vmatpush1.msra.mxu0 %v1737
    %1756 = vmatprep.subr.mxu0 0.0
    %1757 = vmatpush1.msra.mxu0 %v1738
    %1758 = vmatprep.subr.mxu0 0.0
    %1759 = vmatpush1.msra.mxu0 %v1739
    %1760 = vmatprep.subr.mxu0 0.0
    %1761 = vmatpush1.msra.mxu0 %v1740
    %1762 = vmatprep.subr.mxu0 0.0
    %1763 = vmatpush1.msra.mxu0 0.0
    %1764 = vmatprep.subr.mxu0 0.0
    %1765 = vmatpush1.msra.mxu0 0.0
    %1766 = vmatprep.subr.mxu0 0.0
    %1767 = vmatpush1.msra.mxu0 0.0
    %1768 = vmatprep.subr.mxu0 0.0
    %1769 = vmatpush1.msra.mxu0 0.0
    %1770 = vmatprep.subr.mxu0 0.0
    %1771 = vmatpush1.msra.mxu0 0.0
    %1772 = vmatprep.subr.mxu0 0.0
    %1773 = vmatpush1.msra.mxu0 0.0
    %1774 = vmatprep.subr.mxu0 0.0
    %1775 = vmatpush1.msra.mxu0 0.0
    %1776 = vmatprep.subr.mxu0 0.0
    %1777 = vmatpush1.msra.mxu0 0.0
    %1778 = vmatprep.subr.mxu0 0.0
    %1779 = vmatpush1.msra.mxu0 0.0
    %1780 = vmatprep.subr.mxu0 0.0
    %1781 = vmatpush1.msra.mxu0 0.0
    %1782 = vmatprep.subr.mxu0 0.0
    %1783 = vmatpush1.msra.mxu0 0.0
    %1784 = vmatprep.subr.mxu0 0.0
    %1785 = vmatpush1.msra.mxu0 0.0
    %1786 = vmatprep.subr.mxu0 0.0
    %1787 = vmatpush1.msra.mxu0 0.0
    %1788 = vmatprep.subr.mxu0 0.0
    %1789 = vmatpush1.msra.mxu0 0.0
    %1790 = vmatprep.subr.mxu0 0.0
    %1791 = vmatpush1.msra.mxu0 0.0
    %1792 = vmatprep.subr.mxu0 0.0
    %1793 = vmatpush1.msra.mxu0 0.0
    %1794 = vmatprep.subr.mxu0 0.0
    %1795 = vmatpush1.msra.mxu0 0.0
    %1796 = vmatprep.subr.mxu0 0.0
    %1797 = vmatpush1.msra.mxu0 0.0
    %1798 = vmatprep.subr.mxu0 0.0
    %1799 = vmatpush1.msra.mxu0 0.0
    %1800 = vmatprep.subr.mxu0 0.0
    %1801 = vmatpush1.msra.mxu0 0.0
    %1802 = vmatprep.subr.mxu0 0.0
    %1803 = vmatpush1.msra.mxu0 0.0
    %1804 = vmatprep.subr.mxu0 0.0
    %1805 = vmatpush1.msra.mxu0 0.0
    %1806 = vmatprep.subr.mxu0 0.0
    %1807 = vmatpush1.msra.mxu0 0.0
    %1808 = vmatprep.subr.mxu0 0.0
    %1809 = vmatpush1.msra.mxu0 0.0
    %1810 = vmatprep.subr.mxu0 0.0
    %1811 = vmatpush1.msra.mxu0 0.0
    %1812 = vmatprep.subr.mxu0 0.0
    %1813 = vmatpush1.msra.mxu0 0.0
    %1814 = vmatprep.subr.mxu0 0.0
    %1815 = vmatpush1.msra.mxu0 0.0
    %1816 = vmatprep.subr.mxu0 0.0
    %1817 = vmatpush1.msra.mxu0 0.0
    %1818 = vmatprep.mubr.f32.mxu0 0.0
    %1819 = vmatmul.mubr.f32.gmra.mrb[0].mxu0 %v1749
    %v1820 = vpop.f32.mrb[0].mxu0
    %v1821 = vadd.f32 %v1746, %v1820
    %v1822 = vpop.f32.mrb[0].mxu0
    %1823 = vmatprep.mubr.f32.mxu0 0.0
    %1824 = vmatmul.mubr.f32.gmra.mrb[0].mxu0 %v1752
    %v1825 = vpop.f32.mrb[0].mxu0
    %v1826 = vadd.f32 %v1746, %v1825
    %v1827 = vpop.f32.mrb[0].mxu0
    %1828 = vdwg.mxu0
    %1829 = vst.msk [vmem:[#allocation15] sm:$0xff] %vm131, %v1821
    %1830 = vst.msk [vmem:[#allocation15 + $0x8] sm:$0xff] %vm131, %v1826
    // Predicated region
    $region62: #{tpu_custom_call.1} parent=1 // pred_check
      _
    $region63: #{tpu_custom_call.1} parent=1 // pred_check_branch
      %1832 = sbr.rel (0) target = $region65
    $region64: #{tpu_custom_call.1} parent=1 // pred_region
      %s1834 = ssub.s32 256, 256
      %1835 = vsyncadd [#allocation5], %s1834
      %s1836 = sshll.u32 [#allocation15], 4
      %s1837 = int_to_ptr.vmem [resolvable:$true] %s1836
      %1842 = dma.vmem_to_hbm [thread:$0]  %s1837, 256, %s8, [#allocation5], 128, 128, 8
    $region65: #{tpu_custom_call.1} parent=1 // pred_fallthru
      _
    // Predicated region
    $region66: #{tpu_custom_call.1} parent=1 // pred_check
      _
    $region67: #{tpu_custom_call.1} parent=1 // pred_check_branch
      %1844 = sbr.rel (0) target = $region69
    $region68: #{tpu_custom_call.1} parent=1 // pred_region
      %1845 = dma.done [#allocation5], 256
    $region69: #{tpu_custom_call.1} parent=1 // pred_fallthru
      _
    %1846 = vsyncpa [#allocation4], 1
    %1847 = vsyncpa [#allocation7], 1
    %1848 = vsyncpa [#allocation10], 1
    %1849 = vsyncpa [#allocation13], 1
    %1850 = vsyncpa [#allocation5], 1

</llo_original>
